<compile_context>
chip_gen: v5e
topology: v5e:2x2
jax: 0.10.0
libtpu: 0.0.40
codegen_flags: <defaults>
</compile_context>

<pallas_src>
import functools
import math

import jax
import jax.numpy as jnp
from jax.experimental import pallas as pl
from jax.experimental.pallas import tpu as pltpu


def encoder_kernel(x_ref, wqkv_ref, wo_ref, wff_ref, vec_ref, o_ref, acc_ref,
                   *, heads: int, eps: float = 1e-5):
    """One encoder layer for one batch block; layers fused via the depth grid axis.

    Grid = (N // Bn, depth). acc_ref holds the f32 residual stream for the whole
    inner depth axis; o_ref is only written on the final layer.
    """
    d = pl.program_id(1)

    Bn, L, E = o_ref.shape
    hd = E // heads
    R = Bn * L

    # Layer 0: seed the resident f32 residual with the input embeddings.
    @pl.when(d == 0)
    def _():
        acc_ref[...] = x_ref[...].reshape(R, E).astype(jnp.float32)

    h = acc_ref[...]                                   # (R, E) f32 residual stream
    hb = h.astype(jnp.bfloat16)

    # Per-layer parameters (weights bf16, biases/gains f32).
    wqkv = wqkv_ref[0]                                 # (E, 3E)  [Wq*scale | Wk | Wv]
    woh = wo_ref[0]                                    # (heads, hd, E)
    wff = wff_ref[0]                                   # (E, E)
    bq = vec_ref[0, 0:1, :]                            # (1, E)  (pre-scaled by 1/sqrt(hd))
    bk = vec_ref[0, 1:2, :]
    bv = vec_ref[0, 2:3, :]
    bo = vec_ref[0, 3:4, :]
    g1 = vec_ref[0, 4:5, :]
    b1 = vec_ref[0, 5:6, :]
    bff = vec_ref[0, 6:7, :]
    g2 = vec_ref[0, 7:8, :]
    b2 = vec_ref[0, 8:9, :]

    # --- fused QKV projection: one wide MXU matmul ---
    qkv = jnp.dot(hb, wqkv, preferred_element_type=jnp.float32)     # (R, 3E) f32
    qq = qkv[:, 0:E] + bq                                           # scale already folded
    kk = qkv[:, E:2 * E] + bk
    vv = qkv[:, 2 * E:3 * E] + bv

    # --- per (batch-element, head) attention; accumulate output projection ---
    attn_rows = []
    for b in range(Bn):                                 # static unrolled loops
        r0, r1 = b * L, (b + 1) * L
        acc_b = jnp.zeros((L, E), jnp.float32)
        for hI in range(heads):
            c0, c1 = hI * hd, (hI + 1) * hd
            q = qq[r0:r1, c0:c1].astype(jnp.bfloat16)   # (L, hd)
            k = kk[r0:r1, c0:c1].astype(jnp.bfloat16)
            v = vv[r0:r1, c0:c1].astype(jnp.bfloat16)
            s = jnp.einsum('qd,kd->qk', q, k,
                           preferred_element_type=jnp.float32)      # (L, L)
            s = s - jnp.max(s, axis=-1, keepdims=True)
            p = jnp.exp(s)
            p = p * pl.reciprocal(jnp.sum(p, axis=-1, keepdims=True), approx=True)
            ctx = jnp.dot(p.astype(jnp.bfloat16), v,
                          preferred_element_type=jnp.float32)       # (L, hd)
            # Output projection accumulated into a single (L, E) f32 buffer.
            acc_b = acc_b + jnp.dot(ctx.astype(jnp.bfloat16), woh[hI],
                                    preferred_element_type=jnp.float32)
        attn_rows.append(acc_b)
    attn = attn_rows[0] if Bn == 1 else jnp.concatenate(attn_rows, axis=0)
    attn = attn + bo                                                # (R, E)

    # --- residual + LayerNorm 1 (f32 statistics) ---
    h1 = h + attn
    mu1 = jnp.mean(h1, axis=-1, keepdims=True)
    var1 = jnp.mean(jnp.square(h1 - mu1), axis=-1, keepdims=True)
    h1n = (h1 - mu1) * jax.lax.rsqrt(var1 + eps) * g1 + b1

    # --- FFN (single Linear, as declared in the reference module) + residual + LN2 ---
    # TODO(synk): the PyTorch EncoderLayer declares torch.nn.Linear(...) with elided
    # sizes / activation; a single E->E Linear with no nonlinearity is implemented.
    ff = jnp.dot(h1n.astype(jnp.bfloat16), wff,
                 preferred_element_type=jnp.float32) + bff
    h2 = h1n + ff
    mu2 = jnp.mean(h2, axis=-1, keepdims=True)
    var2 = jnp.mean(jnp.square(h2 - mu2), axis=-1, keepdims=True)
    h2n = (h2 - mu2) * jax.lax.rsqrt(var2 + eps) * g2 + b2

    # Residual stays f32 in VMEM scratch across layers.
    acc_ref[...] = h2n

    # Only the final layer writes the (lane-dense, E-wide) output block.
    @pl.when(d == pl.num_programs(1) - 1)
    def _():
        o_ref[...] = h2n.reshape(Bn, L, E).astype(o_ref.dtype)


def encoder_forward(x, packed_params, heads, *, block_n=None, vmem_limit_bytes=None):
    """Full Encoder stack in one pallas_call. x: (N, L, E) -> (N, L, E)."""
    N, L, E = x.shape
    wqkv, woh, wff, vecs = packed_params
    depth = wqkv.shape[0]
    hd = E // heads

    if block_n is None:
        block_n = 1
        for cand in (8, 4, 2, 1):
            if N % cand == 0:
                block_n = cand
                break
    assert N % block_n == 0, "block_n must divide N"

    if vmem_limit_bytes is None:
        # Rough per-generation-safe budget: double-buffered weights + resident
        # activations + attention/projection intermediates, clamped to <= 64 MiB
        # (v7x physical VMEM is 64 MiB; v5e/v6e have 128 MiB).
        w_layer = (E * 3 * E + heads * hd * E + E * E) * 2 + 9 * E * 4
        act = block_n * L * E * (2 * 2 * x.dtype.itemsize + 4)
        inter = block_n * L * 3 * E * 4 + 2 * L * L * 4 + 6 * block_n * L * E * 4
        est = 2 * w_layer + act + inter
        vmem_limit_bytes = min(64 * 1024 * 1024,
                               max(32 * 1024 * 1024, int(1.5 * est)))

    kernel = functools.partial(encoder_kernel, heads=heads)
    return pl.pallas_call(
        kernel,
        out_shape=jax.ShapeDtypeStruct((N, L, E), x.dtype),
        grid_spec=pltpu.PrefetchScalarGridSpec(
            num_scalar_prefetch=0,
            grid=(N // block_n, depth),
            in_specs=[
                pl.BlockSpec((block_n, L, E), lambda n, d: (n, 0, 0)),
                pl.BlockSpec((1, E, 3 * E), lambda n, d: (d, 0, 0)),
                pl.BlockSpec((1, heads, hd, E), lambda n, d: (d, 0, 0, 0)),
                pl.BlockSpec((1, E, E), lambda n, d: (d, 0, 0)),
                pl.BlockSpec((1, 9, E), lambda n, d: (d, 0, 0)),
            ],
            out_specs=pl.BlockSpec((block_n, L, E), lambda n, d: (n, 0, 0)),
            scratch_shapes=[pltpu.VMEM((block_n * L, E), jnp.float32)],
        ),
        compiler_params=pltpu.CompilerParams(
            dimension_semantics=("parallel", "arbitrary"),
            vmem_limit_bytes=vmem_limit_bytes,
        ),
    )(x, wqkv, woh, wff, vecs)


# ----------------------------- parameters ------------------------------------

def init_encoder_params(key, embed_size, hidden_size, heads, depth):
    """Per-layer params in 'torch-like' (E,E)/(1,E) f32 layout."""
    assert embed_size == hidden_size, "residual connections require E == H"
    E = embed_size
    layers = []
    for d in range(depth):
        keys = jax.random.split(jax.random.fold_in(key, d), 6)
        wq = 0.02 * jax.random.normal(keys[0], (E, E), jnp.float32)
        wk = 0.02 * jax.random.normal(keys[1], (E, E), jnp.float32)
        wv = 0.02 * jax.random.normal(keys[2], (E, E), jnp.float32)
        wo = 0.02 * jax.random.normal(keys[3], (E, E), jnp.float32)
        wf = 0.02 * jax.random.normal(keys[4], (E, E), jnp.float32)
        bq = jnp.zeros((1, E), jnp.float32)
        bk = jnp.zeros((1, E), jnp.float32)
        bv = jnp.zeros((1, E), jnp.float32)
        bo = jnp.zeros((1, E), jnp.float32)
        bf = 0.01 * jax.random.normal(keys[5], (1, E), jnp.float32)
        g1 = jnp.ones((1, E), jnp.float32)
        b1 = jnp.zeros((1, E), jnp.float32)
        g2 = jnp.ones((1, E), jnp.float32)
        b2 = jnp.zeros((1, E), jnp.float32)
        layers.append((wq, bq, wk, bk, wv, bv, wo, bo, g1, b1, wf, bf, g2, b2))
    return layers


def pack_encoder_params(layers, heads):
    """Host-side repack into fused-QKV, depth-stacked, bf16-weight kernel layout.

    The attention scale 1/sqrt(hd) is folded into Wq and bq.
    """
    E = layers[0][0].shape[0]
    hd = E // heads
    scale = 1.0 / math.sqrt(hd)

    wqkv_l, wo_l, wf_l, vec_l = [], [], [], []
    for (wq, bq, wk, bk, wv, bv, wo, bo, g1, b1, wf, bf, g2, b2) in layers:
        wqkv_l.append(jnp.concatenate([wq * scale, wk, wv], axis=1))    # (E, 3E)
        wo_l.append(wo.reshape(heads, hd, E))                           # (heads, hd, E)
        wf_l.append(wf)                                                 # (E, E)
        vec_l.append(jnp.concatenate(
            [bq * scale, bk, bv, bo, g1, b1, bf, g2, b2], axis=0))      # (9, E)

    wqkv = jnp.stack(wqkv_l).astype(jnp.bfloat16)   # (depth, E, 3E)
    woh = jnp.stack(wo_l).astype(jnp.bfloat16)      # (depth, heads, hd, E)
    wff = jnp.stack(wf_l).astype(jnp.bfloat16)      # (depth, E, E)
    vecs = jnp.stack(vec_l).astype(jnp.float32)     # (depth, 9, E)
    return wqkv, woh, wff, vecs


# ----------------------------- pure-JAX reference -----------------------------

def encoder_reference(x, layers, heads, eps=1e-5):
    N, L, E = x.shape
    hd = E // heads
    h = x
    for (wq, bq, wk, bk, wv, bv, wo, bo, g1, b1, wf, bf, g2, b2) in layers:
        q = h @ wq + bq
        k = h @ wk + bk
        v = h @ wv + bv
        qh = q.reshape(N, L, heads, hd)
        kh = k.reshape(N, L, heads, hd)
        vh = v.reshape(N, L, heads, hd)
        s = jnp.einsum('nlhd,nmhd->nhlm', qh, kh) / math.sqrt(hd)
        p = jax.nn.softmax(s, axis=-1)
        ctx = jnp.einsum('nhlm,nmhd->nlhd', p, vh).reshape(N, L, E)
        a = ctx @ wo + bo
        h1 = h + a
        mu1 = jnp.mean(h1, -1, keepdims=True)
        var1 = jnp.mean((h1 - mu1) ** 2, -1, keepdims=True)
        h1n = (h1 - mu1) * jax.lax.rsqrt(var1 + eps) * g1 + b1
        f = h1n @ wf + bf
        h2 = h1n + f
        mu2 = jnp.mean(h2, -1, keepdims=True)
        var2 = jnp.mean((h2 - mu2) ** 2, -1, keepdims=True)
        h = (h2 - mu2) * jax.lax.rsqrt(var2 + eps) * g2 + b2
    return h


if __name__ == "__main__":
    N, L = 2, 8
    embed_size = hidden_size = 32
    heads = 4
    depth = 2

    key = jax.random.PRNGKey(0)
    x = jax.random.normal(jax.random.fold_in(key, 123), (N, L, embed_size), jnp.float32)
    layers = init_encoder_params(key, embed_size, hidden_size, heads, depth)
    packed = pack_encoder_params(layers, heads)

    out = encoder_forward(x, packed, heads)
    out = jax.block_until_ready(out)
    assert out.shape == (N, L, hidden_size)
    assert bool(jnp.all(jnp.isfinite(out)))

    ref = encoder_reference(x, layers, heads)
    max_err = float(jnp.max(jnp.abs(out - ref)))
    assert max_err < 5e-2, f"max abs error vs reference: {max_err}"
    print("KERNEL_OK")
</pallas_src>

<mosaic_0001>
module attributes {stable_mosaic.version = 11 : i64} {
  func.func @encoder_kernel(%arg0: i32, %arg1: i32, %arg2: memref<2x8x32xf32, #tpu.memory_space<vmem>>, %arg3: memref<1x32x96xbf16, #tpu.memory_space<vmem>>, %arg4: memref<1x4x8x32xbf16, #tpu.memory_space<vmem>>, %arg5: memref<1x32x32xbf16, #tpu.memory_space<vmem>>, %arg6: memref<1x9x32xf32, #tpu.memory_space<vmem>>, %arg7: memref<2x8x32xf32, #tpu.memory_space<vmem>>, %arg8: memref<16x32xf32, #tpu.memory_space<vmem>>) attributes {dimension_semantics = [#tpu.dimension_semantics<parallel>, #tpu.dimension_semantics<arbitrary>], iteration_bounds = array<i64: 1, 2>, scalar_prefetch = 0 : i64, scratch_operands = 1 : i64, tpu.core_type = #tpu.core_type<tc>, window_params = [{transform_indices = @transform_0, window_bounds = array<i64: 2, 8, 32>}, {transform_indices = @transform_1, window_bounds = array<i64: 1, 32, 96>}, {transform_indices = @transform_2, window_bounds = array<i64: 1, 4, 8, 32>}, {transform_indices = @transform_3, window_bounds = array<i64: 1, 32, 32>}, {transform_indices = @transform_4, window_bounds = array<i64: 1, 9, 32>}, {transform_indices = @transform_5, window_bounds = array<i64: 2, 8, 32>}]} {
    %c0_i32 = arith.constant 0 : i32
    %0 = arith.cmpi eq, %arg1, %c0_i32 : i32
    %1 = arith.extui %0 : i1 to i32
    %c0_i32_0 = arith.constant 0 : i32
    %2 = arith.cmpi ne, %1, %c0_i32_0 : i32
    scf.if %2 {
      %c0_87 = arith.constant 0 : index
      %c0_88 = arith.constant 0 : index
      %c0_89 = arith.constant 0 : index
      %290 = vector.load %arg2[%c0_87, %c0_88, %c0_89] : memref<2x8x32xf32, #tpu.memory_space<vmem>>, vector<2x8x32xf32>
      %291 = vector.shape_cast %290 : vector<2x8x32xf32> to vector<16x32xf32>
      %c0_90 = arith.constant 0 : index
      %c0_91 = arith.constant 0 : index
      %292 = vector.load %arg8[%c0_90, %c0_91] : memref<16x32xf32, #tpu.memory_space<vmem>>, vector<16x32xf32>
      tpu.vector_store %arg8[%c0_90, %c0_91], %291 {strides = array<i32>} : memref<16x32xf32, #tpu.memory_space<vmem>>, vector<16x32xf32>,
    } else {
    }
    %c0 = arith.constant 0 : index
    %c0_1 = arith.constant 0 : index
    %3 = vector.load %arg8[%c0, %c0_1] : memref<16x32xf32, #tpu.memory_space<vmem>>, vector<16x32xf32>
    %4 = arith.truncf %3 : vector<16x32xf32> to vector<16x32xbf16>
    %c0_2 = arith.constant 0 : index
    %c0_3 = arith.constant 0 : index
    %c0_4 = arith.constant 0 : index
    %5 = vector.load %arg3[%c0_2, %c0_3, %c0_4] : memref<1x32x96xbf16, #tpu.memory_space<vmem>>, vector<1x32x96xbf16>
    %6 = vector.shape_cast %5 : vector<1x32x96xbf16> to vector<32x96xbf16>
    %c0_5 = arith.constant 0 : index
    %c0_6 = arith.constant 0 : index
    %c0_7 = arith.constant 0 : index
    %c0_8 = arith.constant 0 : index
    %7 = vector.load %arg4[%c0_5, %c0_6, %c0_7, %c0_8] : memref<1x4x8x32xbf16, #tpu.memory_space<vmem>>, vector<1x4x8x32xbf16>
    %8 = vector.shape_cast %7 : vector<1x4x8x32xbf16> to vector<4x8x32xbf16>
    %c0_9 = arith.constant 0 : index
    %c0_10 = arith.constant 0 : index
    %c0_11 = arith.constant 0 : index
    %9 = vector.load %arg5[%c0_9, %c0_10, %c0_11] : memref<1x32x32xbf16, #tpu.memory_space<vmem>>, vector<1x32x32xbf16>
    %10 = vector.shape_cast %9 : vector<1x32x32xbf16> to vector<32x32xbf16>
    %c0_12 = arith.constant 0 : index
    %c0_13 = arith.constant 0 : index
    %c0_14 = arith.constant 0 : index
    %11 = vector.load %arg6[%c0_12, %c0_13, %c0_14] : memref<1x9x32xf32, #tpu.memory_space<vmem>>, vector<1x1x32xf32>
    %12 = vector.shape_cast %11 : vector<1x1x32xf32> to vector<1x32xf32>
    %c0_15 = arith.constant 0 : index
    %c1 = arith.constant 1 : index
    %c0_16 = arith.constant 0 : index
    %13 = vector.load %arg6[%c0_15, %c1, %c0_16] : memref<1x9x32xf32, #tpu.memory_space<vmem>>, vector<1x1x32xf32>
    %14 = vector.shape_cast %13 : vector<1x1x32xf32> to vector<1x32xf32>
    %c0_17 = arith.constant 0 : index
    %c2 = arith.constant 2 : index
    %c0_18 = arith.constant 0 : index
    %15 = vector.load %arg6[%c0_17, %c2, %c0_18] : memref<1x9x32xf32, #tpu.memory_space<vmem>>, vector<1x1x32xf32>
    %16 = vector.shape_cast %15 : vector<1x1x32xf32> to vector<1x32xf32>
    %c0_19 = arith.constant 0 : index
    %c3 = arith.constant 3 : index
    %c0_20 = arith.constant 0 : index
    %17 = vector.load %arg6[%c0_19, %c3, %c0_20] : memref<1x9x32xf32, #tpu.memory_space<vmem>>, vector<1x1x32xf32>
    %18 = vector.shape_cast %17 : vector<1x1x32xf32> to vector<1x32xf32>
    %c0_21 = arith.constant 0 : index
    %c4 = arith.constant 4 : index
    %c0_22 = arith.constant 0 : index
    %19 = vector.load %arg6[%c0_21, %c4, %c0_22] : memref<1x9x32xf32, #tpu.memory_space<vmem>>, vector<1x1x32xf32>
    %20 = vector.shape_cast %19 : vector<1x1x32xf32> to vector<1x32xf32>
    %c0_23 = arith.constant 0 : index
    %c5 = arith.constant 5 : index
    %c0_24 = arith.constant 0 : index
    %21 = vector.load %arg6[%c0_23, %c5, %c0_24] : memref<1x9x32xf32, #tpu.memory_space<vmem>>, vector<1x1x32xf32>
    %22 = vector.shape_cast %21 : vector<1x1x32xf32> to vector<1x32xf32>
    %c0_25 = arith.constant 0 : index
    %c6 = arith.constant 6 : index
    %c0_26 = arith.constant 0 : index
    %23 = vector.load %arg6[%c0_25, %c6, %c0_26] : memref<1x9x32xf32, #tpu.memory_space<vmem>>, vector<1x1x32xf32>
    %24 = vector.shape_cast %23 : vector<1x1x32xf32> to vector<1x32xf32>
    %c0_27 = arith.constant 0 : index
    %c7 = arith.constant 7 : index
    %c0_28 = arith.constant 0 : index
    %25 = vector.load %arg6[%c0_27, %c7, %c0_28] : memref<1x9x32xf32, #tpu.memory_space<vmem>>, vector<1x1x32xf32>
    %26 = vector.shape_cast %25 : vector<1x1x32xf32> to vector<1x32xf32>
    %c0_29 = arith.constant 0 : index
    %c8 = arith.constant 8 : index
    %c0_30 = arith.constant 0 : index
    %27 = vector.load %arg6[%c0_29, %c8, %c0_30] : memref<1x9x32xf32, #tpu.memory_space<vmem>>, vector<1x1x32xf32>
    %28 = vector.shape_cast %27 : vector<1x1x32xf32> to vector<1x32xf32>
    %cst = arith.constant dense<0.000000e+00> : vector<16x96xf32>
    %29 = tpu.matmul %4, %6, %cst {dimension_numbers = #tpu.dot_dimension_numbers<[1], [0], [0], [1], [0, 0, 1, 1], [], []>} : vector<16x32xbf16>, vector<32x96xbf16>, vector<16x96xf32> -> vector<16x96xf32>
    %30 = vector.extract_strided_slice %29 {offsets = [0, 0], sizes = [16, 32], strides = [1, 1]} : vector<16x96xf32> to vector<16x32xf32>
    %31 = vector.broadcast %12 : vector<1x32xf32> to vector<16x32xf32>
    %32 = arith.addf %30, %31 : vector<16x32xf32>
    %33 = vector.extract_strided_slice %29 {offsets = [0, 32], sizes = [16, 32], strides = [1, 1]} : vector<16x96xf32> to vector<16x32xf32>
    %34 = vector.broadcast %14 : vector<1x32xf32> to vector<16x32xf32>
    %35 = arith.addf %33, %34 : vector<16x32xf32>
    %36 = vector.extract_strided_slice %29 {offsets = [0, 64], sizes = [16, 32], strides = [1, 1]} : vector<16x96xf32> to vector<16x32xf32>
    %37 = vector.broadcast %16 : vector<1x32xf32> to vector<16x32xf32>
    %38 = arith.addf %36, %37 : vector<16x32xf32>
    %cst_31 = arith.constant 0.000000e+00 : f32
    %39 = vector.broadcast %cst_31 : f32 to vector<8x32xf32>
    %40 = vector.extract_strided_slice %32 {offsets = [0, 0], sizes = [8, 8], strides = [1, 1]} : vector<16x32xf32> to vector<8x8xf32>
    %41 = arith.truncf %40 : vector<8x8xf32> to vector<8x8xbf16>
    %42 = vector.extract_strided_slice %35 {offsets = [0, 0], sizes = [8, 8], strides = [1, 1]} : vector<16x32xf32> to vector<8x8xf32>
    %43 = arith.truncf %42 : vector<8x8xf32> to vector<8x8xbf16>
    %44 = vector.extract_strided_slice %38 {offsets = [0, 0], sizes = [8, 8], strides = [1, 1]} : vector<16x32xf32> to vector<8x8xf32>
    %45 = arith.truncf %44 : vector<8x8xf32> to vector<8x8xbf16>
    "tpu.trace_start"() <{level = 10 : i32, message = "qd,kd->qk"}> : () -> ()
    %cst_32 = arith.constant dense<0.000000e+00> : vector<8x8xf32>
    %46 = tpu.matmul %41, %43, %cst_32 {dimension_numbers = #tpu.dot_dimension_numbers<[1], [1], [0], [0], [0, 0, 1, 0], [], []>} : vector<8x8xbf16>, vector<8x8xbf16>, vector<8x8xf32> -> vector<8x8xf32>
    "tpu.trace_stop"() : () -> ()
    %cst_33 = arith.constant dense<0xFF800000> : vector<8xf32>
    %47 = vector.multi_reduction <maximumf>, %46, %cst_33 [1] : vector<8x8xf32> to vector<8xf32>
    %48 = vector.shape_cast %47 : vector<8xf32> to vector<8x1xf32>
    %49 = vector.broadcast %48 : vector<8x1xf32> to vector<8x8xf32>
    %50 = arith.subf %46, %49 : vector<8x8xf32>
    %51 = math.exp %50 : vector<8x8xf32>
    %cst_34 = arith.constant dense<0.000000e+00> : vector<8xf32>
    %52 = vector.multi_reduction <add>, %51, %cst_34 [1] : vector<8x8xf32> to vector<8xf32>
    %53 = vector.shape_cast %52 : vector<8xf32> to vector<8x1xf32>
    %54 = tpu.reciprocal %53 {approx = true} : vector<8x1xf32> -> vector<8x1xf32>
    %55 = vector.broadcast %54 : vector<8x1xf32> to vector<8x8xf32>
    %56 = arith.mulf %51, %55 : vector<8x8xf32>
    %57 = arith.truncf %56 : vector<8x8xf32> to vector<8x8xbf16>
    %cst_35 = arith.constant dense<0.000000e+00> : vector<8x8xf32>
    %58 = tpu.matmul %57, %45, %cst_35 {dimension_numbers = #tpu.dot_dimension_numbers<[1], [0], [0], [1], [0, 0, 1, 1], [], []>} : vector<8x8xbf16>, vector<8x8xbf16>, vector<8x8xf32> -> vector<8x8xf32>
    %59 = arith.truncf %58 : vector<8x8xf32> to vector<8x8xbf16>
    %60 = vector.extract_strided_slice %8 {offsets = [0, 0, 0], sizes = [1, 8, 32], strides = [1, 1, 1]} : vector<4x8x32xbf16> to vector<1x8x32xbf16>
    %61 = vector.shape_cast %60 : vector<1x8x32xbf16> to vector<8x32xbf16>
    %cst_36 = arith.constant dense<0.000000e+00> : vector<8x32xf32>
    %62 = tpu.matmul %59, %61, %cst_36 {dimension_numbers = #tpu.dot_dimension_numbers<[1], [0], [0], [1], [0, 0, 1, 1], [], []>} : vector<8x8xbf16>, vector<8x32xbf16>, vector<8x32xf32> -> vector<8x32xf32>
    %63 = arith.addf %39, %62 : vector<8x32xf32>
    %64 = vector.extract_strided_slice %32 {offsets = [0, 8], sizes = [8, 8], strides = [1, 1]} : vector<16x32xf32> to vector<8x8xf32>
    %65 = arith.truncf %64 : vector<8x8xf32> to vector<8x8xbf16>
    %66 = vector.extract_strided_slice %35 {offsets = [0, 8], sizes = [8, 8], strides = [1, 1]} : vector<16x32xf32> to vector<8x8xf32>
    %67 = arith.truncf %66 : vector<8x8xf32> to vector<8x8xbf16>
    %68 = vector.extract_strided_slice %38 {offsets = [0, 8], sizes = [8, 8], strides = [1, 1]} : vector<16x32xf32> to vector<8x8xf32>
    %69 = arith.truncf %68 : vector<8x8xf32> to vector<8x8xbf16>
    "tpu.trace_start"() <{level = 10 : i32, message = "qd,kd->qk"}> : () -> ()
    %cst_37 = arith.constant dense<0.000000e+00> : vector<8x8xf32>
    %70 = tpu.matmul %65, %67, %cst_37 {dimension_numbers = #tpu.dot_dimension_numbers<[1], [1], [0], [0], [0, 0, 1, 0], [], []>} : vector<8x8xbf16>, vector<8x8xbf16>, vector<8x8xf32> -> vector<8x8xf32>
    "tpu.trace_stop"() : () -> ()
    %cst_38 = arith.constant dense<0xFF800000> : vector<8xf32>
    %71 = vector.multi_reduction <maximumf>, %70, %cst_38 [1] : vector<8x8xf32> to vector<8xf32>
    %72 = vector.shape_cast %71 : vector<8xf32> to vector<8x1xf32>
    %73 = vector.broadcast %72 : vector<8x1xf32> to vector<8x8xf32>
    %74 = arith.subf %70, %73 : vector<8x8xf32>
    %75 = math.exp %74 : vector<8x8xf32>
    %cst_39 = arith.constant dense<0.000000e+00> : vector<8xf32>
    %76 = vector.multi_reduction <add>, %75, %cst_39 [1] : vector<8x8xf32> to vector<8xf32>
    %77 = vector.shape_cast %76 : vector<8xf32> to vector<8x1xf32>
    %78 = tpu.reciprocal %77 {approx = true} : vector<8x1xf32> -> vector<8x1xf32>
    %79 = vector.broadcast %78 : vector<8x1xf32> to vector<8x8xf32>
    %80 = arith.mulf %75, %79 : vector<8x8xf32>
    %81 = arith.truncf %80 : vector<8x8xf32> to vector<8x8xbf16>
    %cst_40 = arith.constant dense<0.000000e+00> : vector<8x8xf32>
    %82 = tpu.matmul %81, %69, %cst_40 {dimension_numbers = #tpu.dot_dimension_numbers<[1], [0], [0], [1], [0, 0, 1, 1], [], []>} : vector<8x8xbf16>, vector<8x8xbf16>, vector<8x8xf32> -> vector<8x8xf32>
    %83 = arith.truncf %82 : vector<8x8xf32> to vector<8x8xbf16>
    %84 = vector.extract_strided_slice %8 {offsets = [1, 0, 0], sizes = [1, 8, 32], strides = [1, 1, 1]} : vector<4x8x32xbf16> to vector<1x8x32xbf16>
    %85 = vector.shape_cast %84 : vector<1x8x32xbf16> to vector<8x32xbf16>
    %cst_41 = arith.constant dense<0.000000e+00> : vector<8x32xf32>
    %86 = tpu.matmul %83, %85, %cst_41 {dimension_numbers = #tpu.dot_dimension_numbers<[1], [0], [0], [1], [0, 0, 1, 1], [], []>} : vector<8x8xbf16>, vector<8x32xbf16>, vector<8x32xf32> -> vector<8x32xf32>
    %87 = arith.addf %63, %86 : vector<8x32xf32>
    %88 = vector.extract_strided_slice %32 {offsets = [0, 16], sizes = [8, 8], strides = [1, 1]} : vector<16x32xf32> to vector<8x8xf32>
    %89 = arith.truncf %88 : vector<8x8xf32> to vector<8x8xbf16>
    %90 = vector.extract_strided_slice %35 {offsets = [0, 16], sizes = [8, 8], strides = [1, 1]} : vector<16x32xf32> to vector<8x8xf32>
    %91 = arith.truncf %90 : vector<8x8xf32> to vector<8x8xbf16>
    %92 = vector.extract_strided_slice %38 {offsets = [0, 16], sizes = [8, 8], strides = [1, 1]} : vector<16x32xf32> to vector<8x8xf32>
    %93 = arith.truncf %92 : vector<8x8xf32> to vector<8x8xbf16>
    "tpu.trace_start"() <{level = 10 : i32, message = "qd,kd->qk"}> : () -> ()
    %cst_42 = arith.constant dense<0.000000e+00> : vector<8x8xf32>
    %94 = tpu.matmul %89, %91, %cst_42 {dimension_numbers = #tpu.dot_dimension_numbers<[1], [1], [0], [0], [0, 0, 1, 0], [], []>} : vector<8x8xbf16>, vector<8x8xbf16>, vector<8x8xf32> -> vector<8x8xf32>
    "tpu.trace_stop"() : () -> ()
    %cst_43 = arith.constant dense<0xFF800000> : vector<8xf32>
    %95 = vector.multi_reduction <maximumf>, %94, %cst_43 [1] : vector<8x8xf32> to vector<8xf32>
    %96 = vector.shape_cast %95 : vector<8xf32> to vector<8x1xf32>
    %97 = vector.broadcast %96 : vector<8x1xf32> to vector<8x8xf32>
    %98 = arith.subf %94, %97 : vector<8x8xf32>
    %99 = math.exp %98 : vector<8x8xf32>
    %cst_44 = arith.constant dense<0.000000e+00> : vector<8xf32>
    %100 = vector.multi_reduction <add>, %99, %cst_44 [1] : vector<8x8xf32> to vector<8xf32>
    %101 = vector.shape_cast %100 : vector<8xf32> to vector<8x1xf32>
    %102 = tpu.reciprocal %101 {approx = true} : vector<8x1xf32> -> vector<8x1xf32>
    %103 = vector.broadcast %102 : vector<8x1xf32> to vector<8x8xf32>
    %104 = arith.mulf %99, %103 : vector<8x8xf32>
    %105 = arith.truncf %104 : vector<8x8xf32> to vector<8x8xbf16>
    %cst_45 = arith.constant dense<0.000000e+00> : vector<8x8xf32>
    %106 = tpu.matmul %105, %93, %cst_45 {dimension_numbers = #tpu.dot_dimension_numbers<[1], [0], [0], [1], [0, 0, 1, 1], [], []>} : vector<8x8xbf16>, vector<8x8xbf16>, vector<8x8xf32> -> vector<8x8xf32>
    %107 = arith.truncf %106 : vector<8x8xf32> to vector<8x8xbf16>
    %108 = vector.extract_strided_slice %8 {offsets = [2, 0, 0], sizes = [1, 8, 32], strides = [1, 1, 1]} : vector<4x8x32xbf16> to vector<1x8x32xbf16>
    %109 = vector.shape_cast %108 : vector<1x8x32xbf16> to vector<8x32xbf16>
    %cst_46 = arith.constant dense<0.000000e+00> : vector<8x32xf32>
    %110 = tpu.matmul %107, %109, %cst_46 {dimension_numbers = #tpu.dot_dimension_numbers<[1], [0], [0], [1], [0, 0, 1, 1], [], []>} : vector<8x8xbf16>, vector<8x32xbf16>, vector<8x32xf32> -> vector<8x32xf32>
    %111 = arith.addf %87, %110 : vector<8x32xf32>
    %112 = vector.extract_strided_slice %32 {offsets = [0, 24], sizes = [8, 8], strides = [1, 1]} : vector<16x32xf32> to vector<8x8xf32>
    %113 = arith.truncf %112 : vector<8x8xf32> to vector<8x8xbf16>
    %114 = vector.extract_strided_slice %35 {offsets = [0, 24], sizes = [8, 8], strides = [1, 1]} : vector<16x32xf32> to vector<8x8xf32>
    %115 = arith.truncf %114 : vector<8x8xf32> to vector<8x8xbf16>
    %116 = vector.extract_strided_slice %38 {offsets = [0, 24], sizes = [8, 8], strides = [1, 1]} : vector<16x32xf32> to vector<8x8xf32>
    %117 = arith.truncf %116 : vector<8x8xf32> to vector<8x8xbf16>
    "tpu.trace_start"() <{level = 10 : i32, message = "qd,kd->qk"}> : () -> ()
    %cst_47 = arith.constant dense<0.000000e+00> : vector<8x8xf32>
    %118 = tpu.matmul %113, %115, %cst_47 {dimension_numbers = #tpu.dot_dimension_numbers<[1], [1], [0], [0], [0, 0, 1, 0], [], []>} : vector<8x8xbf16>, vector<8x8xbf16>, vector<8x8xf32> -> vector<8x8xf32>
    "tpu.trace_stop"() : () -> ()
    %cst_48 = arith.constant dense<0xFF800000> : vector<8xf32>
    %119 = vector.multi_reduction <maximumf>, %118, %cst_48 [1] : vector<8x8xf32> to vector<8xf32>
    %120 = vector.shape_cast %119 : vector<8xf32> to vector<8x1xf32>
    %121 = vector.broadcast %120 : vector<8x1xf32> to vector<8x8xf32>
    %122 = arith.subf %118, %121 : vector<8x8xf32>
    %123 = math.exp %122 : vector<8x8xf32>
    %cst_49 = arith.constant dense<0.000000e+00> : vector<8xf32>
    %124 = vector.multi_reduction <add>, %123, %cst_49 [1] : vector<8x8xf32> to vector<8xf32>
    %125 = vector.shape_cast %124 : vector<8xf32> to vector<8x1xf32>
    %126 = tpu.reciprocal %125 {approx = true} : vector<8x1xf32> -> vector<8x1xf32>
    %127 = vector.broadcast %126 : vector<8x1xf32> to vector<8x8xf32>
    %128 = arith.mulf %123, %127 : vector<8x8xf32>
    %129 = arith.truncf %128 : vector<8x8xf32> to vector<8x8xbf16>
    %cst_50 = arith.constant dense<0.000000e+00> : vector<8x8xf32>
    %130 = tpu.matmul %129, %117, %cst_50 {dimension_numbers = #tpu.dot_dimension_numbers<[1], [0], [0], [1], [0, 0, 1, 1], [], []>} : vector<8x8xbf16>, vector<8x8xbf16>, vector<8x8xf32> -> vector<8x8xf32>
    %131 = arith.truncf %130 : vector<8x8xf32> to vector<8x8xbf16>
    %132 = vector.extract_strided_slice %8 {offsets = [3, 0, 0], sizes = [1, 8, 32], strides = [1, 1, 1]} : vector<4x8x32xbf16> to vector<1x8x32xbf16>
    %133 = vector.shape_cast %132 : vector<1x8x32xbf16> to vector<8x32xbf16>
    %cst_51 = arith.constant dense<0.000000e+00> : vector<8x32xf32>
    %134 = tpu.matmul %131, %133, %cst_51 {dimension_numbers = #tpu.dot_dimension_numbers<[1], [0], [0], [1], [0, 0, 1, 1], [], []>} : vector<8x8xbf16>, vector<8x32xbf16>, vector<8x32xf32> -> vector<8x32xf32>
    %135 = arith.addf %111, %134 : vector<8x32xf32>
    %cst_52 = arith.constant 0.000000e+00 : f32
    %136 = vector.broadcast %cst_52 : f32 to vector<8x32xf32>
    %137 = vector.extract_strided_slice %32 {offsets = [8, 0], sizes = [8, 8], strides = [1, 1]} : vector<16x32xf32> to vector<8x8xf32>
    %138 = arith.truncf %137 : vector<8x8xf32> to vector<8x8xbf16>
    %139 = vector.extract_strided_slice %35 {offsets = [8, 0], sizes = [8, 8], strides = [1, 1]} : vector<16x32xf32> to vector<8x8xf32>
    %140 = arith.truncf %139 : vector<8x8xf32> to vector<8x8xbf16>
    %141 = vector.extract_strided_slice %38 {offsets = [8, 0], sizes = [8, 8], strides = [1, 1]} : vector<16x32xf32> to vector<8x8xf32>
    %142 = arith.truncf %141 : vector<8x8xf32> to vector<8x8xbf16>
    "tpu.trace_start"() <{level = 10 : i32, message = "qd,kd->qk"}> : () -> ()
    %cst_53 = arith.constant dense<0.000000e+00> : vector<8x8xf32>
    %143 = tpu.matmul %138, %140, %cst_53 {dimension_numbers = #tpu.dot_dimension_numbers<[1], [1], [0], [0], [0, 0, 1, 0], [], []>} : vector<8x8xbf16>, vector<8x8xbf16>, vector<8x8xf32> -> vector<8x8xf32>
    "tpu.trace_stop"() : () -> ()
    %cst_54 = arith.constant dense<0xFF800000> : vector<8xf32>
    %144 = vector.multi_reduction <maximumf>, %143, %cst_54 [1] : vector<8x8xf32> to vector<8xf32>
    %145 = vector.shape_cast %144 : vector<8xf32> to vector<8x1xf32>
    %146 = vector.broadcast %145 : vector<8x1xf32> to vector<8x8xf32>
    %147 = arith.subf %143, %146 : vector<8x8xf32>
    %148 = math.exp %147 : vector<8x8xf32>
    %cst_55 = arith.constant dense<0.000000e+00> : vector<8xf32>
    %149 = vector.multi_reduction <add>, %148, %cst_55 [1] : vector<8x8xf32> to vector<8xf32>
    %150 = vector.shape_cast %149 : vector<8xf32> to vector<8x1xf32>
    %151 = tpu.reciprocal %150 {approx = true} : vector<8x1xf32> -> vector<8x1xf32>
    %152 = vector.broadcast %151 : vector<8x1xf32> to vector<8x8xf32>
    %153 = arith.mulf %148, %152 : vector<8x8xf32>
    %154 = arith.truncf %153 : vector<8x8xf32> to vector<8x8xbf16>
    %cst_56 = arith.constant dense<0.000000e+00> : vector<8x8xf32>
    %155 = tpu.matmul %154, %142, %cst_56 {dimension_numbers = #tpu.dot_dimension_numbers<[1], [0], [0], [1], [0, 0, 1, 1], [], []>} : vector<8x8xbf16>, vector<8x8xbf16>, vector<8x8xf32> -> vector<8x8xf32>
    %156 = arith.truncf %155 : vector<8x8xf32> to vector<8x8xbf16>
    %157 = vector.extract_strided_slice %8 {offsets = [0, 0, 0], sizes = [1, 8, 32], strides = [1, 1, 1]} : vector<4x8x32xbf16> to vector<1x8x32xbf16>
    %158 = vector.shape_cast %157 : vector<1x8x32xbf16> to vector<8x32xbf16>
    %cst_57 = arith.constant dense<0.000000e+00> : vector<8x32xf32>
    %159 = tpu.matmul %156, %158, %cst_57 {dimension_numbers = #tpu.dot_dimension_numbers<[1], [0], [0], [1], [0, 0, 1, 1], [], []>} : vector<8x8xbf16>, vector<8x32xbf16>, vector<8x32xf32> -> vector<8x32xf32>
    %160 = arith.addf %136, %159 : vector<8x32xf32>
    %161 = vector.extract_strided_slice %32 {offsets = [8, 8], sizes = [8, 8], strides = [1, 1]} : vector<16x32xf32> to vector<8x8xf32>
    %162 = arith.truncf %161 : vector<8x8xf32> to vector<8x8xbf16>
    %163 = vector.extract_strided_slice %35 {offsets = [8, 8], sizes = [8, 8], strides = [1, 1]} : vector<16x32xf32> to vector<8x8xf32>
    %164 = arith.truncf %163 : vector<8x8xf32> to vector<8x8xbf16>
    %165 = vector.extract_strided_slice %38 {offsets = [8, 8], sizes = [8, 8], strides = [1, 1]} : vector<16x32xf32> to vector<8x8xf32>
    %166 = arith.truncf %165 : vector<8x8xf32> to vector<8x8xbf16>
    "tpu.trace_start"() <{level = 10 : i32, message = "qd,kd->qk"}> : () -> ()
    %cst_58 = arith.constant dense<0.000000e+00> : vector<8x8xf32>
    %167 = tpu.matmul %162, %164, %cst_58 {dimension_numbers = #tpu.dot_dimension_numbers<[1], [1], [0], [0], [0, 0, 1, 0], [], []>} : vector<8x8xbf16>, vector<8x8xbf16>, vector<8x8xf32> -> vector<8x8xf32>
    "tpu.trace_stop"() : () -> ()
    %cst_59 = arith.constant dense<0xFF800000> : vector<8xf32>
    %168 = vector.multi_reduction <maximumf>, %167, %cst_59 [1] : vector<8x8xf32> to vector<8xf32>
    %169 = vector.shape_cast %168 : vector<8xf32> to vector<8x1xf32>
    %170 = vector.broadcast %169 : vector<8x1xf32> to vector<8x8xf32>
    %171 = arith.subf %167, %170 : vector<8x8xf32>
    %172 = math.exp %171 : vector<8x8xf32>
    %cst_60 = arith.constant dense<0.000000e+00> : vector<8xf32>
    %173 = vector.multi_reduction <add>, %172, %cst_60 [1] : vector<8x8xf32> to vector<8xf32>
    %174 = vector.shape_cast %173 : vector<8xf32> to vector<8x1xf32>
    %175 = tpu.reciprocal %174 {approx = true} : vector<8x1xf32> -> vector<8x1xf32>
    %176 = vector.broadcast %175 : vector<8x1xf32> to vector<8x8xf32>
    %177 = arith.mulf %172, %176 : vector<8x8xf32>
    %178 = arith.truncf %177 : vector<8x8xf32> to vector<8x8xbf16>
    %cst_61 = arith.constant dense<0.000000e+00> : vector<8x8xf32>
    %179 = tpu.matmul %178, %166, %cst_61 {dimension_numbers = #tpu.dot_dimension_numbers<[1], [0], [0], [1], [0, 0, 1, 1], [], []>} : vector<8x8xbf16>, vector<8x8xbf16>, vector<8x8xf32> -> vector<8x8xf32>
    %180 = arith.truncf %179 : vector<8x8xf32> to vector<8x8xbf16>
    %181 = vector.extract_strided_slice %8 {offsets = [1, 0, 0], sizes = [1, 8, 32], strides = [1, 1, 1]} : vector<4x8x32xbf16> to vector<1x8x32xbf16>
    %182 = vector.shape_cast %181 : vector<1x8x32xbf16> to vector<8x32xbf16>
    %cst_62 = arith.constant dense<0.000000e+00> : vector<8x32xf32>
    %183 = tpu.matmul %180, %182, %cst_62 {dimension_numbers = #tpu.dot_dimension_numbers<[1], [0], [0], [1], [0, 0, 1, 1], [], []>} : vector<8x8xbf16>, vector<8x32xbf16>, vector<8x32xf32> -> vector<8x32xf32>
    %184 = arith.addf %160, %183 : vector<8x32xf32>
    %185 = vector.extract_strided_slice %32 {offsets = [8, 16], sizes = [8, 8], strides = [1, 1]} : vector<16x32xf32> to vector<8x8xf32>
    %186 = arith.truncf %185 : vector<8x8xf32> to vector<8x8xbf16>
    %187 = vector.extract_strided_slice %35 {offsets = [8, 16], sizes = [8, 8], strides = [1, 1]} : vector<16x32xf32> to vector<8x8xf32>
    %188 = arith.truncf %187 : vector<8x8xf32> to vector<8x8xbf16>
    %189 = vector.extract_strided_slice %38 {offsets = [8, 16], sizes = [8, 8], strides = [1, 1]} : vector<16x32xf32> to vector<8x8xf32>
    %190 = arith.truncf %189 : vector<8x8xf32> to vector<8x8xbf16>
    "tpu.trace_start"() <{level = 10 : i32, message = "qd,kd->qk"}> : () -> ()
    %cst_63 = arith.constant dense<0.000000e+00> : vector<8x8xf32>
    %191 = tpu.matmul %186, %188, %cst_63 {dimension_numbers = #tpu.dot_dimension_numbers<[1], [1], [0], [0], [0, 0, 1, 0], [], []>} : vector<8x8xbf16>, vector<8x8xbf16>, vector<8x8xf32> -> vector<8x8xf32>
    "tpu.trace_stop"() : () -> ()
    %cst_64 = arith.constant dense<0xFF800000> : vector<8xf32>
    %192 = vector.multi_reduction <maximumf>, %191, %cst_64 [1] : vector<8x8xf32> to vector<8xf32>
    %193 = vector.shape_cast %192 : vector<8xf32> to vector<8x1xf32>
    %194 = vector.broadcast %193 : vector<8x1xf32> to vector<8x8xf32>
    %195 = arith.subf %191, %194 : vector<8x8xf32>
    %196 = math.exp %195 : vector<8x8xf32>
    %cst_65 = arith.constant dense<0.000000e+00> : vector<8xf32>
    %197 = vector.multi_reduction <add>, %196, %cst_65 [1] : vector<8x8xf32> to vector<8xf32>
    %198 = vector.shape_cast %197 : vector<8xf32> to vector<8x1xf32>
    %199 = tpu.reciprocal %198 {approx = true} : vector<8x1xf32> -> vector<8x1xf32>
    %200 = vector.broadcast %199 : vector<8x1xf32> to vector<8x8xf32>
    %201 = arith.mulf %196, %200 : vector<8x8xf32>
    %202 = arith.truncf %201 : vector<8x8xf32> to vector<8x8xbf16>
    %cst_66 = arith.constant dense<0.000000e+00> : vector<8x8xf32>
    %203 = tpu.matmul %202, %190, %cst_66 {dimension_numbers = #tpu.dot_dimension_numbers<[1], [0], [0], [1], [0, 0, 1, 1], [], []>} : vector<8x8xbf16>, vector<8x8xbf16>, vector<8x8xf32> -> vector<8x8xf32>
    %204 = arith.truncf %203 : vector<8x8xf32> to vector<8x8xbf16>
    %205 = vector.extract_strided_slice %8 {offsets = [2, 0, 0], sizes = [1, 8, 32], strides = [1, 1, 1]} : vector<4x8x32xbf16> to vector<1x8x32xbf16>
    %206 = vector.shape_cast %205 : vector<1x8x32xbf16> to vector<8x32xbf16>
    %cst_67 = arith.constant dense<0.000000e+00> : vector<8x32xf32>
    %207 = tpu.matmul %204, %206, %cst_67 {dimension_numbers = #tpu.dot_dimension_numbers<[1], [0], [0], [1], [0, 0, 1, 1], [], []>} : vector<8x8xbf16>, vector<8x32xbf16>, vector<8x32xf32> -> vector<8x32xf32>
    %208 = arith.addf %184, %207 : vector<8x32xf32>
    %209 = vector.extract_strided_slice %32 {offsets = [8, 24], sizes = [8, 8], strides = [1, 1]} : vector<16x32xf32> to vector<8x8xf32>
    %210 = arith.truncf %209 : vector<8x8xf32> to vector<8x8xbf16>
    %211 = vector.extract_strided_slice %35 {offsets = [8, 24], sizes = [8, 8], strides = [1, 1]} : vector<16x32xf32> to vector<8x8xf32>
    %212 = arith.truncf %211 : vector<8x8xf32> to vector<8x8xbf16>
    %213 = vector.extract_strided_slice %38 {offsets = [8, 24], sizes = [8, 8], strides = [1, 1]} : vector<16x32xf32> to vector<8x8xf32>
    %214 = arith.truncf %213 : vector<8x8xf32> to vector<8x8xbf16>
    "tpu.trace_start"() <{level = 10 : i32, message = "qd,kd->qk"}> : () -> ()
    %cst_68 = arith.constant dense<0.000000e+00> : vector<8x8xf32>
    %215 = tpu.matmul %210, %212, %cst_68 {dimension_numbers = #tpu.dot_dimension_numbers<[1], [1], [0], [0], [0, 0, 1, 0], [], []>} : vector<8x8xbf16>, vector<8x8xbf16>, vector<8x8xf32> -> vector<8x8xf32>
    "tpu.trace_stop"() : () -> ()
    %cst_69 = arith.constant dense<0xFF800000> : vector<8xf32>
    %216 = vector.multi_reduction <maximumf>, %215, %cst_69 [1] : vector<8x8xf32> to vector<8xf32>
    %217 = vector.shape_cast %216 : vector<8xf32> to vector<8x1xf32>
    %218 = vector.broadcast %217 : vector<8x1xf32> to vector<8x8xf32>
    %219 = arith.subf %215, %218 : vector<8x8xf32>
    %220 = math.exp %219 : vector<8x8xf32>
    %cst_70 = arith.constant dense<0.000000e+00> : vector<8xf32>
    %221 = vector.multi_reduction <add>, %220, %cst_70 [1] : vector<8x8xf32> to vector<8xf32>
    %222 = vector.shape_cast %221 : vector<8xf32> to vector<8x1xf32>
    %223 = tpu.reciprocal %222 {approx = true} : vector<8x1xf32> -> vector<8x1xf32>
    %224 = vector.broadcast %223 : vector<8x1xf32> to vector<8x8xf32>
    %225 = arith.mulf %220, %224 : vector<8x8xf32>
    %226 = arith.truncf %225 : vector<8x8xf32> to vector<8x8xbf16>
    %cst_71 = arith.constant dense<0.000000e+00> : vector<8x8xf32>
    %227 = tpu.matmul %226, %214, %cst_71 {dimension_numbers = #tpu.dot_dimension_numbers<[1], [0], [0], [1], [0, 0, 1, 1], [], []>} : vector<8x8xbf16>, vector<8x8xbf16>, vector<8x8xf32> -> vector<8x8xf32>
    %228 = arith.truncf %227 : vector<8x8xf32> to vector<8x8xbf16>
    %229 = vector.extract_strided_slice %8 {offsets = [3, 0, 0], sizes = [1, 8, 32], strides = [1, 1, 1]} : vector<4x8x32xbf16> to vector<1x8x32xbf16>
    %230 = vector.shape_cast %229 : vector<1x8x32xbf16> to vector<8x32xbf16>
    %cst_72 = arith.constant dense<0.000000e+00> : vector<8x32xf32>
    %231 = tpu.matmul %228, %230, %cst_72 {dimension_numbers = #tpu.dot_dimension_numbers<[1], [0], [0], [1], [0, 0, 1, 1], [], []>} : vector<8x8xbf16>, vector<8x32xbf16>, vector<8x32xf32> -> vector<8x32xf32>
    %232 = arith.addf %208, %231 : vector<8x32xf32>
    %233 = tpu.concatenate %135, %232 in 0 : vector<8x32xf32>, vector<8x32xf32> -> vector<16x32xf32>
    %234 = vector.broadcast %18 : vector<1x32xf32> to vector<16x32xf32>
    %235 = arith.addf %233, %234 : vector<16x32xf32>
    %236 = arith.addf %3, %235 : vector<16x32xf32>
    %cst_73 = arith.constant dense<0.000000e+00> : vector<16xf32>
    %237 = vector.multi_reduction <add>, %236, %cst_73 [1] : vector<16x32xf32> to vector<16xf32>
    %238 = vector.shape_cast %237 : vector<16xf32> to vector<16x1xf32>
    %cst_74 = arith.constant 3.200000e+01 : f32
    %239 = vector.broadcast %cst_74 : f32 to vector<16x1xf32>
    %240 = arith.divf %238, %239 : vector<16x1xf32>
    %241 = vector.broadcast %240 : vector<16x1xf32> to vector<16x32xf32>
    %242 = arith.subf %236, %241 : vector<16x32xf32>
    %243 = arith.mulf %242, %242 : vector<16x32xf32>
    %cst_75 = arith.constant dense<0.000000e+00> : vector<16xf32>
    %244 = vector.multi_reduction <add>, %243, %cst_75 [1] : vector<16x32xf32> to vector<16xf32>
    %245 = vector.shape_cast %244 : vector<16xf32> to vector<16x1xf32>
    %cst_76 = arith.constant 3.200000e+01 : f32
    %246 = vector.broadcast %cst_76 : f32 to vector<16x1xf32>
    %247 = arith.divf %245, %246 : vector<16x1xf32>
    %248 = vector.broadcast %240 : vector<16x1xf32> to vector<16x32xf32>
    %249 = arith.subf %236, %248 : vector<16x32xf32>
    %cst_77 = arith.constant 9.99999974E-6 : f32
    %250 = vector.broadcast %cst_77 : f32 to vector<16x1xf32>
    %251 = arith.addf %247, %250 : vector<16x1xf32>
    %252 = math.rsqrt %251 : vector<16x1xf32>
    %253 = vector.broadcast %252 : vector<16x1xf32> to vector<16x32xf32>
    %254 = arith.mulf %249, %253 : vector<16x32xf32>
    %255 = vector.broadcast %20 : vector<1x32xf32> to vector<16x32xf32>
    %256 = arith.mulf %254, %255 : vector<16x32xf32>
    %257 = vector.broadcast %22 : vector<1x32xf32> to vector<16x32xf32>
    %258 = arith.addf %256, %257 : vector<16x32xf32>
    %259 = arith.truncf %258 : vector<16x32xf32> to vector<16x32xbf16>
    %cst_78 = arith.constant dense<0.000000e+00> : vector<16x32xf32>
    %260 = tpu.matmul %259, %10, %cst_78 {dimension_numbers = #tpu.dot_dimension_numbers<[1], [0], [0], [1], [0, 0, 1, 1], [], []>} : vector<16x32xbf16>, vector<32x32xbf16>, vector<16x32xf32> -> vector<16x32xf32>
    %261 = vector.broadcast %24 : vector<1x32xf32> to vector<16x32xf32>
    %262 = arith.addf %260, %261 : vector<16x32xf32>
    %263 = arith.addf %258, %262 : vector<16x32xf32>
    %cst_79 = arith.constant dense<0.000000e+00> : vector<16xf32>
    %264 = vector.multi_reduction <add>, %263, %cst_79 [1] : vector<16x32xf32> to vector<16xf32>
    %265 = vector.shape_cast %264 : vector<16xf32> to vector<16x1xf32>
    %cst_80 = arith.constant 3.200000e+01 : f32
    %266 = vector.broadcast %cst_80 : f32 to vector<16x1xf32>
    %267 = arith.divf %265, %266 : vector<16x1xf32>
    %268 = vector.broadcast %267 : vector<16x1xf32> to vector<16x32xf32>
    %269 = arith.subf %263, %268 : vector<16x32xf32>
    %270 = arith.mulf %269, %269 : vector<16x32xf32>
    %cst_81 = arith.constant dense<0.000000e+00> : vector<16xf32>
    %271 = vector.multi_reduction <add>, %270, %cst_81 [1] : vector<16x32xf32> to vector<16xf32>
    %272 = vector.shape_cast %271 : vector<16xf32> to vector<16x1xf32>
    %cst_82 = arith.constant 3.200000e+01 : f32
    %273 = vector.broadcast %cst_82 : f32 to vector<16x1xf32>
    %274 = arith.divf %272, %273 : vector<16x1xf32>
    %275 = vector.broadcast %267 : vector<16x1xf32> to vector<16x32xf32>
    %276 = arith.subf %263, %275 : vector<16x32xf32>
    %cst_83 = arith.constant 9.99999974E-6 : f32
    %277 = vector.broadcast %cst_83 : f32 to vector<16x1xf32>
    %278 = arith.addf %274, %277 : vector<16x1xf32>
    %279 = math.rsqrt %278 : vector<16x1xf32>
    %280 = vector.broadcast %279 : vector<16x1xf32> to vector<16x32xf32>
    %281 = arith.mulf %276, %280 : vector<16x32xf32>
    %282 = vector.broadcast %26 : vector<1x32xf32> to vector<16x32xf32>
    %283 = arith.mulf %281, %282 : vector<16x32xf32>
    %284 = vector.broadcast %28 : vector<1x32xf32> to vector<16x32xf32>
    %285 = arith.addf %283, %284 : vector<16x32xf32>
    %c0_84 = arith.constant 0 : index
    %c0_85 = arith.constant 0 : index
    %286 = vector.load %arg8[%c0_84, %c0_85] : memref<16x32xf32, #tpu.memory_space<vmem>>, vector<16x32xf32>
    tpu.vector_store %arg8[%c0_84, %c0_85], %285 {strides = array<i32>} : memref<16x32xf32, #tpu.memory_space<vmem>>, vector<16x32xf32>,
    %c1_i32 = arith.constant 1 : i32
    %287 = arith.cmpi eq, %arg1, %c1_i32 : i32
    %288 = arith.extui %287 : i1 to i32
    %c0_i32_86 = arith.constant 0 : i32
    %289 = arith.cmpi ne, %288, %c0_i32_86 : i32
    scf.if %289 {
      %290 = vector.shape_cast %285 : vector<16x32xf32> to vector<2x8x32xf32>
      %c0_87 = arith.constant 0 : index
      %c0_88 = arith.constant 0 : index
      %c0_89 = arith.constant 0 : index
      %291 = vector.load %arg7[%c0_87, %c0_88, %c0_89] : memref<2x8x32xf32, #tpu.memory_space<vmem>>, vector<2x8x32xf32>
      tpu.vector_store %arg7[%c0_87, %c0_88, %c0_89], %290 {strides = array<i32>} : memref<2x8x32xf32, #tpu.memory_space<vmem>>, vector<2x8x32xf32>,
    } else {
    }
    return
  }
  func.func @transform_0(%arg0: i32, %arg1: i32) -> (i32, i32, i32) {
    %c0_i32 = arith.constant 0 : i32
    %c0_i32_0 = arith.constant 0 : i32
    %c0_i32_1 = arith.constant 0 : i32
    return %arg0, %c0_i32, %c0_i32_0 : i32, i32, i32
  }
  func.func @transform_1(%arg0: i32, %arg1: i32) -> (i32, i32, i32) {
    %c0_i32 = arith.constant 0 : i32
    %c0_i32_0 = arith.constant 0 : i32
    %c0_i32_1 = arith.constant 0 : i32
    return %arg1, %c0_i32, %c0_i32_0 : i32, i32, i32
  }
  func.func @transform_2(%arg0: i32, %arg1: i32) -> (i32, i32, i32, i32) {
    %c0_i32 = arith.constant 0 : i32
    %c0_i32_0 = arith.constant 0 : i32
    %c0_i32_1 = arith.constant 0 : i32
    %c0_i32_2 = arith.constant 0 : i32
    return %arg1, %c0_i32, %c0_i32_0, %c0_i32_1 : i32, i32, i32, i32
  }
  func.func @transform_3(%arg0: i32, %arg1: i32) -> (i32, i32, i32) {
    %c0_i32 = arith.constant 0 : i32
    %c0_i32_0 = arith.constant 0 : i32
    %c0_i32_1 = arith.constant 0 : i32
    return %arg1, %c0_i32, %c0_i32_0 : i32, i32, i32
  }
  func.func @transform_4(%arg0: i32, %arg1: i32) -> (i32, i32, i32) {
    %c0_i32 = arith.constant 0 : i32
    %c0_i32_0 = arith.constant 0 : i32
    %c0_i32_1 = arith.constant 0 : i32
    return %arg1, %c0_i32, %c0_i32_0 : i32, i32, i32
  }
  func.func @transform_5(%arg0: i32, %arg1: i32) -> (i32, i32, i32) {
    %c0_i32 = arith.constant 0 : i32
    %c0_i32_0 = arith.constant 0 : i32
    %c0_i32_1 = arith.constant 0 : i32
    return %arg0, %c0_i32, %c0_i32_0 : i32, i32, i32
  }
}

</mosaic_0001>

<llo_original>
// kernel: tpu_custom_call.1
$region0: #{tpu_custom_call.1}
  #allocation0 [shape = 'u32[]', space=smem, size = 0x4, offset = 0x4, fixed_abs, tag = 'smem constant byte address 0x4 - core index']
  #allocation1 [shape = 'u32[72,128]{1,0:T(1,128)}', space=vmem, size = 0x9000, scoped, tag = 'internal scratch']
  #allocation2 [shape = 'f32[16,32]{1,0:T(8,128)}', space=vmem, size = 0x2000, scoped, tag = 'scratch operand']
  %s0 = inlined_call_operand.vmem [shape: f32[2,8,32], index: 0, kind: input, shape index: {}]
  %s1 = inlined_call_operand.vmem [shape: bf16[2,32,96], index: 1, kind: input, shape index: {}]
  %s2 = inlined_call_operand.hbm [shape: bf16[2,4,8,32], index: 2, kind: input, shape index: {}]
  %s3 = inlined_call_operand.hbm [shape: bf16[2,32,32], index: 3, kind: input, shape index: {}]
  %s4 = inlined_call_operand.vmem [shape: f32[2,9,32], index: 4, kind: input, shape index: {}]
  %s5 = inlined_call_operand.hbm [shape: f32[2,8,32], index: 5, kind: output, shape index: {}]
  %s6 = sld [smem:[#allocation0]]
  $region69: #{tpu_custom_call.1} parent=0
    _
  %s8 = ssub.s32 1, %s6
  %s9 = scalar_select 0, %s8, %s6
  $region1: #{tpu_custom_call.1} parent=0
    #allocation3 [shape = 'u8[16384]{0}', space=vmem, size = 0x4000, scoped, tag = 'input window, operand 2']
    #allocation4 [shape = 's32[2]{0}', space=sflag, size = 0x8, scoped, tag = 'scoped memory for tpu_custom_call.1']
    #allocation5 [shape = 's32[2]{0}', space=sflag, size = 0x8, scoped, tag = 'scoped memory for tpu_custom_call.1']
    #allocation6 [shape = 'u8[16384]{0}', space=vmem, size = 0x4000, scoped, tag = 'input window, operand 3']
    #allocation7 [shape = 's32[2]{0}', space=sflag, size = 0x8, scoped, tag = 'scoped memory for tpu_custom_call.1']
    #allocation8 [shape = 'u8[8192]{0}', space=vmem, size = 0x2000, scoped, tag = 'output window, operand 0, single buffered']
    %10 = vsyncpa [#allocation4], 0
    %s11 = scalar_lea.sflag [#allocation4], 1
    %12 = vsyncpa %s11, 0
    %13 = vsyncpa [#allocation7], 0
    %s14 = scalar_lea.sflag [#allocation7], 1
    %15 = vsyncpa %s14, 0
    %16 = vsyncpa [#allocation5], 0
    loop: start=0, step=1, limit=4
    $region2: #{tpu_custom_call.1} parent=1 // loop_pre_header
      _
    $region3: #{tpu_custom_call.1} parent=1 // loop_header
      %s18 = sphi 0, %s22
      %p19 = scmp.ge.s32.totalorder %s18, 4
      %s25 = sphi 0, %s37
      %s26 = sphi 0, %s33
      %s27 = sphi 0, %s25
      %s28 = sphi 0, %s26
      %s29 = sphi 0, %s27
      %s30 = sphi 0, %s28
      %s40 = sphi 0, %s42
      %s43 = sphi 0, %s40
      %s44 = sphi 0, %s43
      %s60 = sphi 0, %s44
      %s66 = sphi 0, %s68
      %s69 = sphi 0, %s66
      %s70 = sphi 0, %s69
      %s86 = sphi 0, %s70
      %s92 = sphi 0, %s94
      %s95 = sphi 0, %s92
      %s96 = sphi 0, %s95
      %s112 = sphi 0, %s96
      %s118 = sphi 0, %s120
      %s121 = sphi 0, %s118
      %s122 = sphi 0, %s121
      %s138 = sphi 0, %s122
      %s144 = sphi 0, %s146
      %s147 = sphi 0, %s144
      %s148 = sphi 0, %s147
      %s164 = sphi 0, %s148
      %s170 = sphi 0, %s172
      %s173 = sphi 0, %s170
      %s174 = sphi 0, %s173
      %s190 = sphi 0, %s174
    $region4: #{tpu_custom_call.1} parent=1 // loop_header_branch
      %21 = sbr.rel (%p19) target = $region8
    $region5: #{tpu_custom_call.1} parent=1 // loop_body
      %s23 = ssub.s32 %s18, 1
      %s24 = ssub.s32 %s18, 2
      %s31 = sadd.s32 1, %s26
      %p32 = scmp.ge.s32.totalorder %s31, 2
      %s33 = scalar_select %p32, 0, %s31
      %s34 = sadd.s32 1, %s25
      %s35 = scalar_select %p32, %s34, %s25
      %p36 = scmp.ge.s32.totalorder %s35, 1
      %s37 = scalar_select %p36, 0, %s35
      %s38 = ssub.s32 %s25, %s37
      %p39 = scmp.eq.s32.totalorder %s38, 0
      %s41 = sadd.s32 %s40, 1
      %s42 = scalar_select %p39, %s40, %s41
      %p45 = pneg %p39
      %p46 = scmp.eq.s32.totalorder %s18, 1
      %p47 = por %p45, %p46
      %p48 = scmp.ne.s32.totalorder %s40, %s43
      %p49 = scmp.eq.s32.totalorder %s18, 0
      %p50 = por %p48, %p49
      %p51 = scmp.ne.s32.totalorder %s40, %s43
      %p52 = scmp.eq.s32.totalorder %s23, 1
      %p53 = por %p51, %p52
      %p54 = scmp.ne.s32.totalorder %s43, %s44
      %p55 = scmp.eq.s32.totalorder %s23, 0
      %p56 = por %p54, %p55
      %p57 = scmp.ne.s32.totalorder %s43, %s44
      %p58 = scmp.eq.s32.totalorder %s24, 1
      %p59 = por %p57, %p58
      %p61 = scmp.ne.s32.totalorder %s44, %s60
      %p62 = scmp.eq.s32.totalorder %s24, 0
      %p63 = por %p61, %p62
      %s64 = ssub.s32 %s26, %s33
      %p65 = scmp.eq.s32.totalorder %s64, 0
      %s67 = sadd.s32 %s66, 1
      %s68 = scalar_select %p65, %s66, %s67
      %p71 = pneg %p65
      %p72 = scmp.eq.s32.totalorder %s18, 1
      %p73 = por %p71, %p72
      %p74 = scmp.ne.s32.totalorder %s66, %s69
      %p75 = scmp.eq.s32.totalorder %s18, 0
      %p76 = por %p74, %p75
      %p77 = scmp.ne.s32.totalorder %s66, %s69
      %p78 = scmp.eq.s32.totalorder %s23, 1
      %p79 = por %p77, %p78
      %p80 = scmp.ne.s32.totalorder %s69, %s70
      %p81 = scmp.eq.s32.totalorder %s23, 0
      %p82 = por %p80, %p81
      %p83 = scmp.ne.s32.totalorder %s69, %s70
      %p84 = scmp.eq.s32.totalorder %s24, 1
      %p85 = por %p83, %p84
      %p87 = scmp.ne.s32.totalorder %s70, %s86
      %p88 = scmp.eq.s32.totalorder %s24, 0
      %p89 = por %p87, %p88
      %s90 = ssub.s32 %s26, %s33
      %p91 = scmp.eq.s32.totalorder %s90, 0
      %s93 = sadd.s32 %s92, 1
      %s94 = scalar_select %p91, %s92, %s93
      %p97 = pneg %p91
      %p98 = scmp.eq.s32.totalorder %s18, 1
      %p99 = por %p97, %p98
      %p100 = scmp.ne.s32.totalorder %s92, %s95
      %p101 = scmp.eq.s32.totalorder %s18, 0
      %p102 = por %p100, %p101
      %p103 = scmp.ne.s32.totalorder %s92, %s95
      %p104 = scmp.eq.s32.totalorder %s23, 1
      %p105 = por %p103, %p104
      %p106 = scmp.ne.s32.totalorder %s95, %s96
      %p107 = scmp.eq.s32.totalorder %s23, 0
      %p108 = por %p106, %p107
      %p109 = scmp.ne.s32.totalorder %s95, %s96
      %p110 = scmp.eq.s32.totalorder %s24, 1
      %p111 = por %p109, %p110
      %p113 = scmp.ne.s32.totalorder %s96, %s112
      %p114 = scmp.eq.s32.totalorder %s24, 0
      %p115 = por %p113, %p114
      %s116 = ssub.s32 %s26, %s33
      %p117 = scmp.eq.s32.totalorder %s116, 0
      %s119 = sadd.s32 %s118, 1
      %s120 = scalar_select %p117, %s118, %s119
      %p123 = pneg %p117
      %p124 = scmp.eq.s32.totalorder %s18, 1
      %p125 = por %p123, %p124
      %p126 = scmp.ne.s32.totalorder %s118, %s121
      %p127 = scmp.eq.s32.totalorder %s18, 0
      %p128 = por %p126, %p127
      %p129 = scmp.ne.s32.totalorder %s118, %s121
      %p130 = scmp.eq.s32.totalorder %s23, 1
      %p131 = por %p129, %p130
      %p132 = scmp.ne.s32.totalorder %s121, %s122
      %p133 = scmp.eq.s32.totalorder %s23, 0
      %p134 = por %p132, %p133
      %p135 = scmp.ne.s32.totalorder %s121, %s122
      %p136 = scmp.eq.s32.totalorder %s24, 1
      %p137 = por %p135, %p136
      %p139 = scmp.ne.s32.totalorder %s122, %s138
      %p140 = scmp.eq.s32.totalorder %s24, 0
      %p141 = por %p139, %p140
      %s142 = ssub.s32 %s26, %s33
      %p143 = scmp.eq.s32.totalorder %s142, 0
      %s145 = sadd.s32 %s144, 1
      %s146 = scalar_select %p143, %s144, %s145
      %p149 = pneg %p143
      %p150 = scmp.eq.s32.totalorder %s18, 1
      %p151 = por %p149, %p150
      %p152 = scmp.ne.s32.totalorder %s144, %s147
      %p153 = scmp.eq.s32.totalorder %s18, 0
      %p154 = por %p152, %p153
      %p155 = scmp.ne.s32.totalorder %s144, %s147
      %p156 = scmp.eq.s32.totalorder %s23, 1
      %p157 = por %p155, %p156
      %p158 = scmp.ne.s32.totalorder %s147, %s148
      %p159 = scmp.eq.s32.totalorder %s23, 0
      %p160 = por %p158, %p159
      %p161 = scmp.ne.s32.totalorder %s147, %s148
      %p162 = scmp.eq.s32.totalorder %s24, 1
      %p163 = por %p161, %p162
      %p165 = scmp.ne.s32.totalorder %s148, %s164
      %p166 = scmp.eq.s32.totalorder %s24, 0
      %p167 = por %p165, %p166
      %s168 = ssub.s32 %s25, %s37
      %p169 = scmp.eq.s32.totalorder %s168, 0
      %s171 = sadd.s32 %s170, 1
      %s172 = scalar_select %p169, %s170, %s171
      %p175 = pneg %p169
      %p176 = scmp.eq.s32.totalorder %s18, 1
      %p177 = por %p175, %p176
      %p178 = scmp.ne.s32.totalorder %s170, %s173
      %p179 = scmp.eq.s32.totalorder %s18, 0
      %p180 = por %p178, %p179
      %p181 = scmp.ne.s32.totalorder %s170, %s173
      %p182 = scmp.eq.s32.totalorder %s23, 1
      %p183 = por %p181, %p182
      %p184 = scmp.ne.s32.totalorder %s173, %s174
      %p185 = scmp.eq.s32.totalorder %s23, 0
      %p186 = por %p184, %p185
      %p187 = scmp.ne.s32.totalorder %s173, %s174
      %p188 = scmp.eq.s32.totalorder %s24, 1
      %p189 = por %p187, %p188
      %p191 = scmp.ne.s32.totalorder %s174, %s190
      %p192 = scmp.eq.s32.totalorder %s24, 0
      %p193 = por %p191, %p192
      %p194 = scmp.le.s32.totalorder 1, %s18
      %p195 = scmp.lt.s32.totalorder %s18, 3
      %p196 = pnand %p194, %p195
      %p197 = pneg %p196
      // Predicated region
      $region9: #{tpu_custom_call.1} parent=5 // pred_check
        _
      $region10: #{tpu_custom_call.1} parent=5 // pred_check_branch
        %199 = sbr.rel (%p196) target = $region12
      $region11: #{tpu_custom_call.1} parent=5 // pred_region
        %s200 = ssub.s32 %s18, 1
        // Predicated region
        $region13: #{tpu_custom_call.1} parent=11 // pred_check
          %p201 = pneg %p56
        $region14: #{tpu_custom_call.1} parent=11 // pred_check_branch
          %203 = sbr.rel (%p201) target = $region16
        $region15: #{tpu_custom_call.1} parent=11 // pred_region
          %s204 = smul.u32 2, %s27
          %p205 = scmp.lt.s32.totalorder %s204, 1
          %s206 = scalar_select %p205, %s204, 1
          %s207 = smul.addr %s206, 8
          %s208 = scalar_lea.vmem %s0, %s207
          %s209 = smul.u32 2, %s27
        $region16: #{tpu_custom_call.1} parent=11 // pred_fallthru
          _
      $region12: #{tpu_custom_call.1} parent=5 // pred_fallthru
        _
      %p210 = scmp.lt.s32.totalorder %s18, 2
      // Predicated region
      $region17: #{tpu_custom_call.1} parent=5 // pred_check
        %p211 = pneg %p210
      $region18: #{tpu_custom_call.1} parent=5 // pred_check_branch
        %213 = sbr.rel (%p211) target = $region20
      $region19: #{tpu_custom_call.1} parent=5 // pred_region
        // Predicated region
        $region21: #{tpu_custom_call.1} parent=19 // pred_check
          %p214 = pneg %p76
        $region22: #{tpu_custom_call.1} parent=19 // pred_check_branch
          %216 = sbr.rel (%p214) target = $region24
        $region23: #{tpu_custom_call.1} parent=19 // pred_region
          %p217 = scmp.lt.s32.totalorder %s26, 1
          %s218 = scalar_select %p217, %s26, 1
          %s219 = smul.addr %s218, 4
          %s220 = smul.addr %s219, 4
          %s221 = scalar_lea.vmem %s1, %s220
        $region24: #{tpu_custom_call.1} parent=19 // pred_fallthru
          _
        // Predicated region
        $region25: #{tpu_custom_call.1} parent=19 // pred_check
          %p222 = pneg %p102
        $region26: #{tpu_custom_call.1} parent=19 // pred_check_branch
          %224 = sbr.rel (%p222) target = $region28
        $region27: #{tpu_custom_call.1} parent=19 // pred_region
          %s225 = sand.u32 %s92, 1
          %s226 = scalar_lea.sflag [#allocation4], %s225
          %s227 = sand.u32 %s92, 1
          %s228 = smul.addr %s227, 16
          %s229 = scalar_lea.vmem [#allocation3], %s228
          %231 = vsyncadd %s226, 0
          %s232 = smul.addr %s26, 4
          %s233 = smul.addr %s232, 4
          %s234 = scalar_lea.hbm %s2, %s233
          %s235 = sshll.u32 %s234, 4
          %s236 = int_to_ptr.hbm [resolvable:$true] %s235
          %s237 = sshll.u32 %s229, 4
          %s238 = int_to_ptr.vmem [resolvable:$true] %s237
          %243 = dma.hbm_to_vmem [thread:$0]  %s236, 256, %s238, %s226, 64, 64, 4
        $region28: #{tpu_custom_call.1} parent=19 // pred_fallthru
          _
        // Predicated region
        $region29: #{tpu_custom_call.1} parent=19 // pred_check
          %p244 = pneg %p128
        $region30: #{tpu_custom_call.1} parent=19 // pred_check_branch
          %246 = sbr.rel (%p244) target = $region32
        $region31: #{tpu_custom_call.1} parent=19 // pred_region
          %s247 = sand.u32 %s118, 1
          %s248 = scalar_lea.sflag [#allocation7], %s247
          %s249 = sand.u32 %s118, 1
          %s250 = smul.addr %s249, 16
          %s251 = scalar_lea.vmem [#allocation6], %s250
          %253 = vsyncadd %s248, 0
          %s254 = smul.addr %s26, 4
          %s255 = smul.addr %s254, 4
          %s256 = scalar_lea.hbm %s3, %s255
          %s257 = sshll.u32 %s256, 4
          %s258 = int_to_ptr.hbm [resolvable:$true] %s257
          %s259 = sshll.u32 %s251, 4
          %s260 = int_to_ptr.vmem [resolvable:$true] %s259
          %265 = dma.hbm_to_vmem [thread:$0]  %s258, 256, %s260, %s248, 64, 64, 4
        $region32: #{tpu_custom_call.1} parent=19 // pred_fallthru
          _
        // Predicated region
        $region33: #{tpu_custom_call.1} parent=19 // pred_check
          %p266 = pneg %p154
        $region34: #{tpu_custom_call.1} parent=19 // pred_check_branch
          %268 = sbr.rel (%p266) target = $region36
        $region35: #{tpu_custom_call.1} parent=19 // pred_region
          %p269 = scmp.lt.s32.totalorder %s26, 1
          %s270 = scalar_select %p269, %s26, 1
          %s271 = smul.addr %s270, 2
          %s272 = smul.addr %s271, 8
          %s273 = scalar_lea.vmem %s4, %s272
        $region36: #{tpu_custom_call.1} parent=19 // pred_fallthru
          _
      $region20: #{tpu_custom_call.1} parent=5 // pred_fallthru
        _
      %p274 = scmp.le.s32.totalorder 1, %s18
      %p275 = scmp.lt.s32.totalorder %s18, 3
      %p276 = pnand %p274, %p275
      %p277 = pneg %p276
      // Predicated region
      $region37: #{tpu_custom_call.1} parent=5 // pred_check
        _
      $region38: #{tpu_custom_call.1} parent=5 // pred_check_branch
        %279 = sbr.rel (%p276) target = $region40
      $region39: #{tpu_custom_call.1} parent=5 // pred_region
        %s280 = ssub.s32 %s18, 1
        %s281 = sand.u32 %s95, 1
        %s282 = scalar_lea.sflag [#allocation4], %s281
        %s283 = sand.u32 %s95, 1
        %s284 = smul.addr %s283, 16
        %s285 = scalar_lea.vmem [#allocation3], %s284
        // Predicated region
        $region41: #{tpu_custom_call.1} parent=39 // pred_check
          %p286 = pneg %p108
        $region42: #{tpu_custom_call.1} parent=39 // pred_check_branch
          %288 = sbr.rel (%p286) target = $region44
        $region43: #{tpu_custom_call.1} parent=39 // pred_region
          %290 = dma.done %s282, 256
        $region44: #{tpu_custom_call.1} parent=39 // pred_fallthru
          _
        %s291 = sand.u32 %s121, 1
        %s292 = scalar_lea.sflag [#allocation7], %s291
        %s293 = sand.u32 %s121, 1
        %s294 = smul.addr %s293, 16
        %s295 = scalar_lea.vmem [#allocation6], %s294
        // Predicated region
        $region45: #{tpu_custom_call.1} parent=39 // pred_check
          %p296 = pneg %p134
        $region46: #{tpu_custom_call.1} parent=39 // pred_check_branch
          %298 = sbr.rel (%p296) target = $region48
        $region47: #{tpu_custom_call.1} parent=39 // pred_region
          %300 = dma.done %s292, 256
        $region48: #{tpu_custom_call.1} parent=39 // pred_fallthru
          _
        %s301 = smul.u32 2, %s27
        %p302 = scmp.lt.s32.totalorder %s301, 1
        %s303 = scalar_select %p302, %s301, 1
        %s304 = smul.addr %s303, 8
        %s305 = scalar_lea.vmem %s0, %s304
        %p306 = pneg %p56
        %p307 = pneg %p53
        %p308 = scmp.lt.s32.totalorder %s28, 1
        %s309 = scalar_select %p308, %s28, 1
        %s310 = smul.addr %s309, 4
        %s311 = smul.addr %s310, 4
        %s312 = scalar_lea.vmem %s1, %s311
        %p313 = pneg %p82
        %p314 = pneg %p79
        %s315 = sand.u32 %s95, 1
        %s316 = scalar_lea.sflag [#allocation4], %s315
        %s317 = sand.u32 %s95, 1
        %s318 = smul.addr %s317, 16
        %s319 = scalar_lea.vmem [#allocation3], %s318
        %p320 = pneg %p108
        %p321 = pneg %p105
        %s322 = sand.u32 %s121, 1
        %s323 = scalar_lea.sflag [#allocation7], %s322
        %s324 = sand.u32 %s121, 1
        %s325 = smul.addr %s324, 16
        %s326 = scalar_lea.vmem [#allocation6], %s325
        %p327 = pneg %p134
        %p328 = pneg %p131
        %p329 = scmp.lt.s32.totalorder %s28, 1
        %s330 = scalar_select %p329, %s28, 1
        %s331 = smul.addr %s330, 2
        %s332 = smul.addr %s331, 8
        %s333 = scalar_lea.vmem %s4, %s332
        %p334 = pneg %p160
        %p335 = pneg %p157
        %p336 = pneg %p186
        %p337 = pneg %p183
        %s338 = smul.u32 2, %s27
        %p339 = scmp.lt.s32.totalorder %s338, 1
        %s340 = scalar_select %p339, %s338, 1
        %s341 = smul.addr %s340, 8
        %s342 = scalar_lea.vmem %s0, %s341
        %s343 = smul.u32 2, %s27
        %p344 = scmp.lt.s32.totalorder %s28, 1
        %s345 = scalar_select %p344, %s28, 1
        %s346 = smul.addr %s345, 4
        %s347 = smul.addr %s346, 4
        %s348 = scalar_lea.vmem %s1, %s347
        %p349 = scmp.lt.s32.totalorder %s28, 1
        %s350 = scalar_select %p349, %s28, 1
        %s351 = smul.addr %s350, 2
        %s352 = smul.addr %s351, 8
        %s353 = scalar_lea.vmem %s4, %s352
        %s354 = smul.u32 2, %s27
        %p356 = scmp.eq.s32.totalorder %s28, 0
        // Predicated region
        $region49: #{tpu_custom_call.1} parent=39 // pred_check
          %p357 = pneg %p356
        $region50: #{tpu_custom_call.1} parent=39 // pred_check_branch
          %359 = sbr.rel (%p357) target = $region52
        $region51: #{tpu_custom_call.1} parent=39 // pred_region
          %v360 = vld [vmem:[%s342] sm:$0xff]
          %v361 = vld [vmem:[%s342 + $0x8] sm:$0xff]
          %vm362 = vcmask 261120
          %363 = vst.msk [vmem:[#allocation2] sm:$0xff] %vm362, %v360
          %364 = vst.msk [vmem:[#allocation2 + $0x8] sm:$0xff] %vm362, %v361
        $region52: #{tpu_custom_call.1} parent=39 // pred_fallthru
          _
        %v365 = vld [vmem:[#allocation2] sm:$0xff]
        %v366 = vld [vmem:[#allocation2 + $0x8] sm:$0xff]
        %v367 = vpack.c.bf16 %v366, %v365
        %v368 = vld [vmem:[%s348] sm:$0xf]
        %v369 = vld [vmem:[%s348 + $0x4] sm:$0xf]
        %v370 = vld [vmem:[%s348 + $0x8] sm:$0xf]
        %v371 = vld [vmem:[%s348 + $0xc] sm:$0xf]
        %v372 = vld [vmem:[%s285] sm:$0xf]
        %v373 = vld [vmem:[%s285 + $0x4] sm:$0xf]
        %v374 = vld [vmem:[%s285 + $0x8] sm:$0xf]
        %v375 = vld [vmem:[%s285 + $0xc] sm:$0xf]
        %v376 = vld [vmem:[%s295] sm:$0xf]
        %v377 = vld [vmem:[%s295 + $0x4] sm:$0xf]
        %v378 = vld [vmem:[%s295 + $0x8] sm:$0xf]
        %v379 = vld [vmem:[%s295 + $0xc] sm:$0xf]
        %v380 = vld [vmem:[%s353] sm:$0x1]
        %v381 = vld [vmem:[%s353 + $0x1] sm:$0x1]
        %v382 = vld [vmem:[%s353 + $0x2] sm:$0x1]
        %v383 = vld [vmem:[%s353 + $0x3] sm:$0x1]
        %v384 = vld [vmem:[%s353 + $0x4] sm:$0x1]
        %v385 = vld [vmem:[%s353 + $0x5] sm:$0x1]
        %v386 = vld [vmem:[%s353 + $0x6] sm:$0x1]
        %v387 = vld [vmem:[%s353 + $0x7] sm:$0x1]
        %v388 = vld [vmem:[%s353 + $0x8] sm:$0x1]
        %v393 = vunpack.c.l.b16 %v368
        %v394 = vunpack.c.l.b16 %v369
        %v395 = vunpack.c.l.b16 %v370
        %v396 = vunpack.c.l.b16 %v371
        %v397 = vpack.c.b16 %v394, %v393
        %v398 = vpack.c.b16 %v396, %v395
        %vm401 = vcmask 261120
        %v403 = vsel %vm401, %v367, 0
        %405 = vmatpush.bf16.msra.mxu0 0
        %406 = vmatpush.bf16.msra.mxu0 0
        %407 = vmatpush.bf16.msra.mxu0 0
        %408 = vmatpush.bf16.msra.mxu0 0
        %409 = vmatpush.bf16.msra.mxu0 0
        %410 = vmatpush.bf16.msra.mxu0 0
        %411 = vmatpush.bf16.msra.mxu0 %v398
        %412 = vmatpush.bf16.msra.mxu0 %v397
        %413 = vmatmul.bf16.gmra.mxu0 %v403
        %v414 = vpop.f32.mrf.mxu0
        %v415 = vadd.f32 0.0, %v414
        %v416 = vpop.f32.mrf.mxu0
        %v417 = vadd.f32 0.0, %v416
        %418 = vdwg.mxu0
        %v419 = vperm.slane %v380, 0
        %v420 = vadd.f32 %v415, %v419
        %v421 = vadd.f32 %v417, %v419
        %v422 = vperm.slane %v381, 0
        %424 = vrot.lane.b32.xlu0 %v422, 32
        %v425 = vpop.permute.xlu0 %424
        %v427 = vadd.f32 %v415, %v425
        %v428 = vadd.f32 %v417, %v425
        %v429 = vperm.slane %v382, 0
        %431 = vrot.lane.b32.xlu0 %v429, 64
        %v432 = vpop.permute.xlu0 %431
        %v434 = vadd.f32 %v415, %v432
        %v435 = vadd.f32 %v417, %v432
        %v436 = vpack.c.bf16 %v420, %v420
        %v437 = vpack.c.bf16 %v427, %v427
        %v438 = vpack.c.bf16 %v434, %v434
        %440 = vrot.lane.b32.xlu0 %v437, 96
        %v441 = vpop.permute.xlu0 %440
        %vm442 = vcmask 64512
        %v444 = vsel %vm442, %v436, 0
        %v447 = vsel %vm442, %v441, 0
        %449 = vmatpush.bf16.xpose.msra.mxu0 0
        %450 = vmatpush.bf16.xpose.msra.mxu0 0
        %451 = vmatpush.bf16.xpose.msra.mxu0 0
        %452 = vmatpush.bf16.xpose.msra.mxu0 0
        %453 = vmatpush.bf16.xpose.msra.mxu0 0
        %454 = vmatpush.bf16.xpose.msra.mxu0 0
        %455 = vmatpush.bf16.xpose.msra.mxu0 0
        %456 = vmatpush.bf16.xpose.msra.mxu0 %v447
        %457 = vmatmul.bf16.gmra.mxu0 %v444
        %v458 = vpop.f32.mrf.mxu0
        %v459 = vadd.f32 0.0, %v458
        %v460 = vpop.f32.mrf.mxu0
        %461 = vdwg.mxu0
        %v462 = vsel %vm442, %v459, -inf
        %463 = vmax.xlane.f32.xlu0 %v462
        %v464 = vpop.xlane.xlu0 %463
        %v465 = vsub.f32 %v459, %v464
        %v466 = vmul.f32 %v465, 1.442695
        %v467 = vpow.pop %v466
        %v468 = vsel %vm442, %v467, 0.0
        %469 = vadd.xlane.f32.xlu0 %v468
        %v470 = vpop.xlane.xlu0 %469
        %v471 = vrcp.pop %v470
        %v472 = vmul.f32 %v467, %v471
        %v473 = vpack.c.bf16 %v472, %v472
        %475 = vrot.lane.b32.xlu0 %v438, 64
        %v476 = vpop.permute.xlu0 %475
        %v478 = vsel %vm442, %v473, 0
        %vm480 = vcmask 1043456
        %v482 = vsel %vm480, %v476, 0
        %484 = vmatpush.bf16.msra.mxu0 0
        %485 = vmatpush.bf16.msra.mxu0 0
        %486 = vmatpush.bf16.msra.mxu0 0
        %487 = vmatpush.bf16.msra.mxu0 0
        %488 = vmatpush.bf16.msra.mxu0 0
        %489 = vmatpush.bf16.msra.mxu0 0
        %490 = vmatpush.bf16.msra.mxu0 0
        %491 = vmatpush.bf16.msra.mxu0 %v482
        %492 = vmatmul.bf16.gmra.mxu0 %v478
        %v493 = vpop.f32.mrf.mxu0
        %v494 = vadd.f32 0.0, %v493
        %v495 = vpop.f32.mrf.mxu0
        %496 = vdwg.mxu0
        %v497 = vpack.c.bf16 %v494, %v494
        %499 = vrot.lane.b32.xlu0 %v436, 120
        %v500 = vpop.permute.xlu0 %499
        %501 = vrot.lane.b32.xlu0 %v437, 88
        %v502 = vpop.permute.xlu0 %501
        %v504 = vsel %vm442, %v500, 0
        %v507 = vsel %vm442, %v502, 0
        %509 = vmatpush.bf16.xpose.msra.mxu0 0
        %510 = vmatpush.bf16.xpose.msra.mxu0 0
        %511 = vmatpush.bf16.xpose.msra.mxu0 0
        %512 = vmatpush.bf16.xpose.msra.mxu0 0
        %513 = vmatpush.bf16.xpose.msra.mxu0 0
        %514 = vmatpush.bf16.xpose.msra.mxu0 0
        %515 = vmatpush.bf16.xpose.msra.mxu0 0
        %516 = vmatpush.bf16.xpose.msra.mxu0 %v507
        %517 = vmatmul.bf16.gmra.mxu0 %v504
        %v518 = vpop.f32.mrf.mxu0
        %v519 = vadd.f32 0.0, %v518
        %v520 = vpop.f32.mrf.mxu0
        %521 = vdwg.mxu0
        %v522 = vsel %vm442, %v519, -inf
        %523 = vmax.xlane.f32.xlu0 %v522
        %v524 = vpop.xlane.xlu0 %523
        %v525 = vsub.f32 %v519, %v524
        %v526 = vmul.f32 %v525, 1.442695
        %v527 = vpow.pop %v526
        %v528 = vsel %vm442, %v527, 0.0
        %529 = vadd.xlane.f32.xlu0 %v528
        %v530 = vpop.xlane.xlu0 %529
        %v531 = vrcp.pop %v530
        %v532 = vmul.f32 %v527, %v531
        %v533 = vpack.c.bf16 %v532, %v532
        %534 = vrot.lane.b32.xlu0 %v438, 56
        %v535 = vpop.permute.xlu0 %534
        %v537 = vsel %vm442, %v533, 0
        %v540 = vsel %vm480, %v535, 0
        %542 = vmatpush.bf16.msra.mxu0 0
        %543 = vmatpush.bf16.msra.mxu0 0
        %544 = vmatpush.bf16.msra.mxu0 0
        %545 = vmatpush.bf16.msra.mxu0 0
        %546 = vmatpush.bf16.msra.mxu0 0
        %547 = vmatpush.bf16.msra.mxu0 0
        %548 = vmatpush.bf16.msra.mxu0 0
        %549 = vmatpush.bf16.msra.mxu0 %v540
        %550 = vmatmul.bf16.gmra.mxu0 %v537
        %v551 = vpop.f32.mrf.mxu0
        %v552 = vadd.f32 0.0, %v551
        %v553 = vpop.f32.mrf.mxu0
        %554 = vdwg.mxu0
        %v555 = vpack.c.bf16 %v552, %v552
        %v557 = vsel %vm442, %v555, 0
        %v560 = vsel %vm480, %v373, 0
        %562 = vmatpush.bf16.msra.mxu0 0
        %563 = vmatpush.bf16.msra.mxu0 0
        %564 = vmatpush.bf16.msra.mxu0 0
        %565 = vmatpush.bf16.msra.mxu0 0
        %566 = vmatpush.bf16.msra.mxu0 0
        %567 = vmatpush.bf16.msra.mxu0 0
        %568 = vmatpush.bf16.msra.mxu0 0
        %569 = vmatpush.bf16.msra.mxu0 %v560
        %570 = vmatmul.bf16.gmra.mxu0 %v557
        %v571 = vpop.f32.mrf.mxu0
        %v572 = vadd.f32 0.0, %v571
        %v573 = vpop.f32.mrf.mxu0
        %574 = vdwg.mxu0
        %v576 = vsel %vm442, %v497, 0
        %v579 = vsel %vm480, %v372, 0
        %581 = vmatpush.bf16.msra.mxu0 0
        %582 = vmatpush.bf16.msra.mxu0 0
        %583 = vmatpush.bf16.msra.mxu0 0
        %584 = vmatpush.bf16.msra.mxu0 0
        %585 = vmatpush.bf16.msra.mxu0 0
        %586 = vmatpush.bf16.msra.mxu0 0
        %587 = vmatpush.bf16.msra.mxu0 0
        %588 = vmatpush.bf16.msra.mxu0 %v579
        %589 = vmatmul.bf16.gmra.mxu0 %v576
        %v590 = vpop.f32.mrf.mxu0
        %v591 = vadd.f32 %v572, %v590
        %v592 = vpop.f32.mrf.mxu0
        %593 = vdwg.mxu0
        %594 = vrot.lane.b32.xlu0 %v436, 112
        %v595 = vpop.permute.xlu0 %594
        %596 = vrot.lane.b32.xlu0 %v437, 80
        %v597 = vpop.permute.xlu0 %596
        %v599 = vsel %vm442, %v595, 0
        %v602 = vsel %vm442, %v597, 0
        %604 = vmatpush.bf16.xpose.msra.mxu0 0
        %605 = vmatpush.bf16.xpose.msra.mxu0 0
        %606 = vmatpush.bf16.xpose.msra.mxu0 0
        %607 = vmatpush.bf16.xpose.msra.mxu0 0
        %608 = vmatpush.bf16.xpose.msra.mxu0 0
        %609 = vmatpush.bf16.xpose.msra.mxu0 0
        %610 = vmatpush.bf16.xpose.msra.mxu0 0
        %611 = vmatpush.bf16.xpose.msra.mxu0 %v602
        %612 = vmatmul.bf16.gmra.mxu0 %v599
        %v613 = vpop.f32.mrf.mxu0
        %v614 = vadd.f32 0.0, %v613
        %v615 = vpop.f32.mrf.mxu0
        %616 = vdwg.mxu0
        %v617 = vsel %vm442, %v614, -inf
        %618 = vmax.xlane.f32.xlu0 %v617
        %v619 = vpop.xlane.xlu0 %618
        %v620 = vsub.f32 %v614, %v619
        %v621 = vmul.f32 %v620, 1.442695
        %v622 = vpow.pop %v621
        %v623 = vsel %vm442, %v622, 0.0
        %624 = vadd.xlane.f32.xlu0 %v623
        %v625 = vpop.xlane.xlu0 %624
        %v626 = vrcp.pop %v625
        %v627 = vmul.f32 %v622, %v626
        %v628 = vpack.c.bf16 %v627, %v627
        %629 = vrot.lane.b32.xlu0 %v438, 48
        %v630 = vpop.permute.xlu0 %629
        %v632 = vsel %vm442, %v628, 0
        %v635 = vsel %vm480, %v630, 0
        %637 = vmatpush.bf16.msra.mxu0 0
        %638 = vmatpush.bf16.msra.mxu0 0
        %639 = vmatpush.bf16.msra.mxu0 0
        %640 = vmatpush.bf16.msra.mxu0 0
        %641 = vmatpush.bf16.msra.mxu0 0
        %642 = vmatpush.bf16.msra.mxu0 0
        %643 = vmatpush.bf16.msra.mxu0 0
        %644 = vmatpush.bf16.msra.mxu0 %v635
        %645 = vmatmul.bf16.gmra.mxu0 %v632
        %v646 = vpop.f32.mrf.mxu0
        %v647 = vadd.f32 0.0, %v646
        %v648 = vpop.f32.mrf.mxu0
        %649 = vdwg.mxu0
        %v650 = vpack.c.bf16 %v647, %v647
        %v652 = vsel %vm442, %v650, 0
        %v655 = vsel %vm480, %v374, 0
        %657 = vmatpush.bf16.msra.mxu0 0
        %658 = vmatpush.bf16.msra.mxu0 0
        %659 = vmatpush.bf16.msra.mxu0 0
        %660 = vmatpush.bf16.msra.mxu0 0
        %661 = vmatpush.bf16.msra.mxu0 0
        %662 = vmatpush.bf16.msra.mxu0 0
        %663 = vmatpush.bf16.msra.mxu0 0
        %664 = vmatpush.bf16.msra.mxu0 %v655
        %665 = vmatmul.bf16.gmra.mxu0 %v652
        %v666 = vpop.f32.mrf.mxu0
        %v667 = vadd.f32 0.0, %v666
        %v668 = vpop.f32.mrf.mxu0
        %669 = vdwg.mxu0
        %v670 = vadd.f32 %v591, %v667
        %671 = vrot.lane.b32.xlu0 %v436, 104
        %v672 = vpop.permute.xlu0 %671
        %673 = vrot.lane.b32.xlu0 %v437, 72
        %v674 = vpop.permute.xlu0 %673
        %v676 = vsel %vm442, %v672, 0
        %v679 = vsel %vm442, %v674, 0
        %681 = vmatpush.bf16.xpose.msra.mxu0 0
        %682 = vmatpush.bf16.xpose.msra.mxu0 0
        %683 = vmatpush.bf16.xpose.msra.mxu0 0
        %684 = vmatpush.bf16.xpose.msra.mxu0 0
        %685 = vmatpush.bf16.xpose.msra.mxu0 0
        %686 = vmatpush.bf16.xpose.msra.mxu0 0
        %687 = vmatpush.bf16.xpose.msra.mxu0 0
        %688 = vmatpush.bf16.xpose.msra.mxu0 %v679
        %689 = vmatmul.bf16.gmra.mxu0 %v676
        %v690 = vpop.f32.mrf.mxu0
        %v691 = vadd.f32 0.0, %v690
        %v692 = vpop.f32.mrf.mxu0
        %693 = vdwg.mxu0
        %v694 = vsel %vm442, %v691, -inf
        %695 = vmax.xlane.f32.xlu0 %v694
        %v696 = vpop.xlane.xlu0 %695
        %v697 = vsub.f32 %v691, %v696
        %v698 = vmul.f32 %v697, 1.442695
        %v699 = vpow.pop %v698
        %v700 = vsel %vm442, %v699, 0.0
        %701 = vadd.xlane.f32.xlu0 %v700
        %v702 = vpop.xlane.xlu0 %701
        %v703 = vrcp.pop %v702
        %v704 = vmul.f32 %v699, %v703
        %v705 = vpack.c.bf16 %v704, %v704
        %706 = vrot.lane.b32.xlu0 %v438, 40
        %v707 = vpop.permute.xlu0 %706
        %v709 = vsel %vm442, %v705, 0
        %v712 = vsel %vm480, %v707, 0
        %714 = vmatpush.bf16.msra.mxu0 0
        %715 = vmatpush.bf16.msra.mxu0 0
        %716 = vmatpush.bf16.msra.mxu0 0
        %717 = vmatpush.bf16.msra.mxu0 0
        %718 = vmatpush.bf16.msra.mxu0 0
        %719 = vmatpush.bf16.msra.mxu0 0
        %720 = vmatpush.bf16.msra.mxu0 0
        %721 = vmatpush.bf16.msra.mxu0 %v712
        %722 = vmatmul.bf16.gmra.mxu0 %v709
        %v723 = vpop.f32.mrf.mxu0
        %v724 = vadd.f32 0.0, %v723
        %v725 = vpop.f32.mrf.mxu0
        %726 = vdwg.mxu0
        %v727 = vpack.c.bf16 %v724, %v724
        %v729 = vsel %vm442, %v727, 0
        %v732 = vsel %vm480, %v375, 0
        %734 = vmatpush.bf16.msra.mxu0 0
        %735 = vmatpush.bf16.msra.mxu0 0
        %736 = vmatpush.bf16.msra.mxu0 0
        %737 = vmatpush.bf16.msra.mxu0 0
        %738 = vmatpush.bf16.msra.mxu0 0
        %739 = vmatpush.bf16.msra.mxu0 0
        %740 = vmatpush.bf16.msra.mxu0 0
        %741 = vmatpush.bf16.msra.mxu0 %v732
        %742 = vmatmul.bf16.gmra.mxu0 %v729
        %v743 = vpop.f32.mrf.mxu0
        %v744 = vadd.f32 0.0, %v743
        %v745 = vpop.f32.mrf.mxu0
        %746 = vdwg.mxu0
        %v747 = vadd.f32 %v670, %v744
        %v748 = vpack.c.bf16 %v421, %v421
        %v749 = vpack.c.bf16 %v428, %v428
        %v750 = vpack.c.bf16 %v435, %v435
        %752 = vrot.lane.b32.xlu0 %v749, 96
        %v753 = vpop.permute.xlu0 %752
        %v755 = vsel %vm442, %v748, 0
        %v758 = vsel %vm442, %v753, 0
        %760 = vmatpush.bf16.xpose.msra.mxu0 0
        %761 = vmatpush.bf16.xpose.msra.mxu0 0
        %762 = vmatpush.bf16.xpose.msra.mxu0 0
        %763 = vmatpush.bf16.xpose.msra.mxu0 0
        %764 = vmatpush.bf16.xpose.msra.mxu0 0
        %765 = vmatpush.bf16.xpose.msra.mxu0 0
        %766 = vmatpush.bf16.xpose.msra.mxu0 0
        %767 = vmatpush.bf16.xpose.msra.mxu0 %v758
        %768 = vmatmul.bf16.gmra.mxu0 %v755
        %v769 = vpop.f32.mrf.mxu0
        %v770 = vadd.f32 0.0, %v769
        %v771 = vpop.f32.mrf.mxu0
        %772 = vdwg.mxu0
        %v773 = vsel %vm442, %v770, -inf
        %774 = vmax.xlane.f32.xlu0 %v773
        %v775 = vpop.xlane.xlu0 %774
        %v776 = vsub.f32 %v770, %v775
        %v777 = vmul.f32 %v776, 1.442695
        %v778 = vpow.pop %v777
        %v779 = vsel %vm442, %v778, 0.0
        %780 = vadd.xlane.f32.xlu0 %v779
        %v781 = vpop.xlane.xlu0 %780
        %v782 = vrcp.pop %v781
        %v783 = vmul.f32 %v778, %v782
        %v784 = vpack.c.bf16 %v783, %v783
        %786 = vrot.lane.b32.xlu0 %v750, 64
        %v787 = vpop.permute.xlu0 %786
        %v789 = vsel %vm442, %v784, 0
        %v792 = vsel %vm480, %v787, 0
        %794 = vmatpush.bf16.msra.mxu0 0
        %795 = vmatpush.bf16.msra.mxu0 0
        %796 = vmatpush.bf16.msra.mxu0 0
        %797 = vmatpush.bf16.msra.mxu0 0
        %798 = vmatpush.bf16.msra.mxu0 0
        %799 = vmatpush.bf16.msra.mxu0 0
        %800 = vmatpush.bf16.msra.mxu0 0
        %801 = vmatpush.bf16.msra.mxu0 %v792
        %802 = vmatmul.bf16.gmra.mxu0 %v789
        %v803 = vpop.f32.mrf.mxu0
        %v804 = vadd.f32 0.0, %v803
        %v805 = vpop.f32.mrf.mxu0
        %806 = vdwg.mxu0
        %v807 = vpack.c.bf16 %v804, %v804
        %809 = vrot.lane.b32.xlu0 %v748, 120
        %v810 = vpop.permute.xlu0 %809
        %811 = vrot.lane.b32.xlu0 %v749, 88
        %v812 = vpop.permute.xlu0 %811
        %v814 = vsel %vm442, %v810, 0
        %v817 = vsel %vm442, %v812, 0
        %819 = vmatpush.bf16.xpose.msra.mxu0 0
        %820 = vmatpush.bf16.xpose.msra.mxu0 0
        %821 = vmatpush.bf16.xpose.msra.mxu0 0
        %822 = vmatpush.bf16.xpose.msra.mxu0 0
        %823 = vmatpush.bf16.xpose.msra.mxu0 0
        %824 = vmatpush.bf16.xpose.msra.mxu0 0
        %825 = vmatpush.bf16.xpose.msra.mxu0 0
        %826 = vmatpush.bf16.xpose.msra.mxu0 %v817
        %827 = vmatmul.bf16.gmra.mxu0 %v814
        %v828 = vpop.f32.mrf.mxu0
        %v829 = vadd.f32 0.0, %v828
        %v830 = vpop.f32.mrf.mxu0
        %831 = vdwg.mxu0
        %v832 = vsel %vm442, %v829, -inf
        %833 = vmax.xlane.f32.xlu0 %v832
        %v834 = vpop.xlane.xlu0 %833
        %v835 = vsub.f32 %v829, %v834
        %v836 = vmul.f32 %v835, 1.442695
        %v837 = vpow.pop %v836
        %v838 = vsel %vm442, %v837, 0.0
        %839 = vadd.xlane.f32.xlu0 %v838
        %v840 = vpop.xlane.xlu0 %839
        %v841 = vrcp.pop %v840
        %v842 = vmul.f32 %v837, %v841
        %v843 = vpack.c.bf16 %v842, %v842
        %844 = vrot.lane.b32.xlu0 %v750, 56
        %v845 = vpop.permute.xlu0 %844
        %v847 = vsel %vm442, %v843, 0
        %v850 = vsel %vm480, %v845, 0
        %852 = vmatpush.bf16.msra.mxu0 0
        %853 = vmatpush.bf16.msra.mxu0 0
        %854 = vmatpush.bf16.msra.mxu0 0
        %855 = vmatpush.bf16.msra.mxu0 0
        %856 = vmatpush.bf16.msra.mxu0 0
        %857 = vmatpush.bf16.msra.mxu0 0
        %858 = vmatpush.bf16.msra.mxu0 0
        %859 = vmatpush.bf16.msra.mxu0 %v850
        %860 = vmatmul.bf16.gmra.mxu0 %v847
        %v861 = vpop.f32.mrf.mxu0
        %v862 = vadd.f32 0.0, %v861
        %v863 = vpop.f32.mrf.mxu0
        %864 = vdwg.mxu0
        %v865 = vpack.c.bf16 %v862, %v862
        %v867 = vsel %vm442, %v865, 0
        %869 = vmatpush.bf16.msra.mxu0 0
        %870 = vmatpush.bf16.msra.mxu0 0
        %871 = vmatpush.bf16.msra.mxu0 0
        %872 = vmatpush.bf16.msra.mxu0 0
        %873 = vmatpush.bf16.msra.mxu0 0
        %874 = vmatpush.bf16.msra.mxu0 0
        %875 = vmatpush.bf16.msra.mxu0 0
        %876 = vmatpush.bf16.msra.mxu0 %v560
        %877 = vmatmul.bf16.gmra.mxu0 %v867
        %v878 = vpop.f32.mrf.mxu0
        %v879 = vadd.f32 0.0, %v878
        %v880 = vpop.f32.mrf.mxu0
        %881 = vdwg.mxu0
        %v883 = vsel %vm442, %v807, 0
        %885 = vmatpush.bf16.msra.mxu0 0
        %886 = vmatpush.bf16.msra.mxu0 0
        %887 = vmatpush.bf16.msra.mxu0 0
        %888 = vmatpush.bf16.msra.mxu0 0
        %889 = vmatpush.bf16.msra.mxu0 0
        %890 = vmatpush.bf16.msra.mxu0 0
        %891 = vmatpush.bf16.msra.mxu0 0
        %892 = vmatpush.bf16.msra.mxu0 %v579
        %893 = vmatmul.bf16.gmra.mxu0 %v883
        %v894 = vpop.f32.mrf.mxu0
        %v895 = vadd.f32 %v879, %v894
        %v896 = vpop.f32.mrf.mxu0
        %897 = vdwg.mxu0
        %898 = vrot.lane.b32.xlu0 %v748, 112
        %v899 = vpop.permute.xlu0 %898
        %900 = vrot.lane.b32.xlu0 %v749, 80
        %v901 = vpop.permute.xlu0 %900
        %v903 = vsel %vm442, %v899, 0
        %v906 = vsel %vm442, %v901, 0
        %908 = vmatpush.bf16.xpose.msra.mxu0 0
        %909 = vmatpush.bf16.xpose.msra.mxu0 0
        %910 = vmatpush.bf16.xpose.msra.mxu0 0
        %911 = vmatpush.bf16.xpose.msra.mxu0 0
        %912 = vmatpush.bf16.xpose.msra.mxu0 0
        %913 = vmatpush.bf16.xpose.msra.mxu0 0
        %914 = vmatpush.bf16.xpose.msra.mxu0 0
        %915 = vmatpush.bf16.xpose.msra.mxu0 %v906
        %916 = vmatmul.bf16.gmra.mxu0 %v903
        %v917 = vpop.f32.mrf.mxu0
        %v918 = vadd.f32 0.0, %v917
        %v919 = vpop.f32.mrf.mxu0
        %920 = vdwg.mxu0
        %v921 = vsel %vm442, %v918, -inf
        %922 = vmax.xlane.f32.xlu0 %v921
        %v923 = vpop.xlane.xlu0 %922
        %v924 = vsub.f32 %v918, %v923
        %v925 = vmul.f32 %v924, 1.442695
        %v926 = vpow.pop %v925
        %v927 = vsel %vm442, %v926, 0.0
        %928 = vadd.xlane.f32.xlu0 %v927
        %v929 = vpop.xlane.xlu0 %928
        %v930 = vrcp.pop %v929
        %v931 = vmul.f32 %v926, %v930
        %v932 = vpack.c.bf16 %v931, %v931
        %933 = vrot.lane.b32.xlu0 %v750, 48
        %v934 = vpop.permute.xlu0 %933
        %v936 = vsel %vm442, %v932, 0
        %v939 = vsel %vm480, %v934, 0
        %941 = vmatpush.bf16.msra.mxu0 0
        %942 = vmatpush.bf16.msra.mxu0 0
        %943 = vmatpush.bf16.msra.mxu0 0
        %944 = vmatpush.bf16.msra.mxu0 0
        %945 = vmatpush.bf16.msra.mxu0 0
        %946 = vmatpush.bf16.msra.mxu0 0
        %947 = vmatpush.bf16.msra.mxu0 0
        %948 = vmatpush.bf16.msra.mxu0 %v939
        %949 = vmatmul.bf16.gmra.mxu0 %v936
        %v950 = vpop.f32.mrf.mxu0
        %v951 = vadd.f32 0.0, %v950
        %v952 = vpop.f32.mrf.mxu0
        %953 = vdwg.mxu0
        %v954 = vpack.c.bf16 %v951, %v951
        %v956 = vsel %vm442, %v954, 0
        %958 = vmatpush.bf16.msra.mxu0 0
        %959 = vmatpush.bf16.msra.mxu0 0
        %960 = vmatpush.bf16.msra.mxu0 0
        %961 = vmatpush.bf16.msra.mxu0 0
        %962 = vmatpush.bf16.msra.mxu0 0
        %963 = vmatpush.bf16.msra.mxu0 0
        %964 = vmatpush.bf16.msra.mxu0 0
        %965 = vmatpush.bf16.msra.mxu0 %v655
        %966 = vmatmul.bf16.gmra.mxu0 %v956
        %v967 = vpop.f32.mrf.mxu0
        %v968 = vadd.f32 0.0, %v967
        %v969 = vpop.f32.mrf.mxu0
        %970 = vdwg.mxu0
        %v971 = vadd.f32 %v895, %v968
        %972 = vrot.lane.b32.xlu0 %v748, 104
        %v973 = vpop.permute.xlu0 %972
        %974 = vrot.lane.b32.xlu0 %v749, 72
        %v975 = vpop.permute.xlu0 %974
        %v977 = vsel %vm442, %v973, 0
        %v980 = vsel %vm442, %v975, 0
        %982 = vmatpush.bf16.xpose.msra.mxu0 0
        %983 = vmatpush.bf16.xpose.msra.mxu0 0
        %984 = vmatpush.bf16.xpose.msra.mxu0 0
        %985 = vmatpush.bf16.xpose.msra.mxu0 0
        %986 = vmatpush.bf16.xpose.msra.mxu0 0
        %987 = vmatpush.bf16.xpose.msra.mxu0 0
        %988 = vmatpush.bf16.xpose.msra.mxu0 0
        %989 = vmatpush.bf16.xpose.msra.mxu0 %v980
        %990 = vmatmul.bf16.gmra.mxu0 %v977
        %v991 = vpop.f32.mrf.mxu0
        %v992 = vadd.f32 0.0, %v991
        %v993 = vpop.f32.mrf.mxu0
        %994 = vdwg.mxu0
        %v995 = vsel %vm442, %v992, -inf
        %996 = vmax.xlane.f32.xlu0 %v995
        %v997 = vpop.xlane.xlu0 %996
        %v998 = vsub.f32 %v992, %v997
        %v999 = vmul.f32 %v998, 1.442695
        %v1000 = vpow.pop %v999
        %v1001 = vsel %vm442, %v1000, 0.0
        %1002 = vadd.xlane.f32.xlu0 %v1001
        %v1003 = vpop.xlane.xlu0 %1002
        %v1004 = vrcp.pop %v1003
        %v1005 = vmul.f32 %v1000, %v1004
        %v1006 = vpack.c.bf16 %v1005, %v1005
        %1007 = vrot.lane.b32.xlu0 %v750, 40
        %v1008 = vpop.permute.xlu0 %1007
        %v1010 = vsel %vm442, %v1006, 0
        %v1013 = vsel %vm480, %v1008, 0
        %1015 = vmatpush.bf16.msra.mxu0 0
        %1016 = vmatpush.bf16.msra.mxu0 0
        %1017 = vmatpush.bf16.msra.mxu0 0
        %1018 = vmatpush.bf16.msra.mxu0 0
        %1019 = vmatpush.bf16.msra.mxu0 0
        %1020 = vmatpush.bf16.msra.mxu0 0
        %1021 = vmatpush.bf16.msra.mxu0 0
        %1022 = vmatpush.bf16.msra.mxu0 %v1013
        %1023 = vmatmul.bf16.gmra.mxu0 %v1010
        %v1024 = vpop.f32.mrf.mxu0
        %v1025 = vadd.f32 0.0, %v1024
        %v1026 = vpop.f32.mrf.mxu0
        %1027 = vdwg.mxu0
        %v1028 = vpack.c.bf16 %v1025, %v1025
        %v1030 = vsel %vm442, %v1028, 0
        %1032 = vmatpush.bf16.msra.mxu0 0
        %1033 = vmatpush.bf16.msra.mxu0 0
        %1034 = vmatpush.bf16.msra.mxu0 0
        %1035 = vmatpush.bf16.msra.mxu0 0
        %1036 = vmatpush.bf16.msra.mxu0 0
        %1037 = vmatpush.bf16.msra.mxu0 0
        %1038 = vmatpush.bf16.msra.mxu0 0
        %1039 = vmatpush.bf16.msra.mxu0 %v732
        %1040 = vmatmul.bf16.gmra.mxu0 %v1030
        %v1041 = vpop.f32.mrf.mxu0
        %v1042 = vadd.f32 0.0, %v1041
        %v1043 = vpop.f32.mrf.mxu0
        %1044 = vdwg.mxu0
        %v1045 = vadd.f32 %v971, %v1042
        %v1046 = vperm.slane %v383, 0
        %v1047 = vadd.f32 %v747, %v1046
        %v1048 = vadd.f32 %v1045, %v1046
        %v1049 = vadd.f32 %v365, %v1047
        %v1050 = vadd.f32 %v366, %v1048
        %v1051 = vsel %vm401, %v1049, 0.0
        %1052 = vadd.xlane.f32.xlu0 %v1051
        %v1053 = vpop.xlane.xlu0 %1052
        %v1054 = vsel %vm401, %v1050, 0.0
        %1055 = vadd.xlane.f32.xlu0 %v1054
        %v1056 = vpop.xlane.xlu0 %1055
        %v1057 = vrcp.pop 32.0
        %v1058 = vmul.f32 32.0, %v1057
        %v1059 = vsub.f32 1.0, %v1058
        %v1060 = vmul.f32 %v1057, %v1059
        %v1061 = vadd.f32 %v1057, %v1060
        %vm1062 = vweird.f32 %v1057
        %v1063 = vsel %vm1062, %v1057, %v1061
        %v1064 = vmul.f32 %v1053, %v1063
        %v1065 = vmul.f32 %v1056, %v1063
        %v1066 = vsub.f32 %v1049, %v1064
        %v1067 = vsub.f32 %v1050, %v1065
        %v1068 = vmul.f32 %v1066, %v1066
        %v1069 = vmul.f32 %v1067, %v1067
        %v1070 = vsel %vm401, %v1068, 0.0
        %1071 = vadd.xlane.f32.xlu0 %v1070
        %v1072 = vpop.xlane.xlu0 %1071
        %v1073 = vsel %vm401, %v1069, 0.0
        %1074 = vadd.xlane.f32.xlu0 %v1073
        %v1075 = vpop.xlane.xlu0 %1074
        %v1076 = vmul.f32 %v1072, %v1063
        %v1077 = vmul.f32 %v1075, %v1063
        %v1078 = vadd.f32 %v1076, 1e-05
        %v1079 = vadd.f32 %v1077, 1e-05
        %v1080 = vrsqrt.pop %v1078
        %v1081 = vmul.f32 %v1080, %v1078
        %v1082 = vmul.f32 %v1081, %v1080
        %v1083 = vmul.f32 0.5, %v1082
        %v1084 = vsub.f32 1.5, %v1083
        %v1085 = vmul.f32 %v1080, %v1084
        %vm1086 = vweird.f32 %v1078
        %vm1087 = vweird.f32 %v1080
        %vm1088 = vmor %vm1086, %vm1087
        %v1089 = vsel %vm1088, %v1080, %v1085
        %v1090 = vrsqrt.pop %v1079
        %v1091 = vmul.f32 %v1090, %v1079
        %v1092 = vmul.f32 %v1091, %v1090
        %v1093 = vmul.f32 0.5, %v1092
        %v1094 = vsub.f32 1.5, %v1093
        %v1095 = vmul.f32 %v1090, %v1094
        %vm1096 = vweird.f32 %v1079
        %vm1097 = vweird.f32 %v1090
        %vm1098 = vmor %vm1096, %vm1097
        %v1099 = vsel %vm1098, %v1090, %v1095
        %v1100 = vmul.f32 %v1066, %v1089
        %v1101 = vmul.f32 %v1067, %v1099
        %v1102 = vperm.slane %v384, 0
        %v1103 = vmul.f32 %v1100, %v1102
        %v1104 = vmul.f32 %v1101, %v1102
        %v1105 = vperm.slane %v385, 0
        %v1106 = vadd.f32 %v1103, %v1105
        %v1107 = vadd.f32 %v1104, %v1105
        %v1108 = vpack.c.bf16 %v1107, %v1106
        %v1109 = vperm.slane %v386, 0
        %v1114 = vunpack.c.l.b16 %v376
        %v1115 = vunpack.c.l.b16 %v377
        %v1116 = vunpack.c.l.b16 %v378
        %v1117 = vunpack.c.l.b16 %v379
        %v1118 = vpack.c.b16 %v1115, %v1114
        %v1119 = vpack.c.b16 %v1117, %v1116
        %v1123 = vsel %vm401, %v1108, 0
        %1125 = vmatpush.bf16.msra.mxu0 0
        %1126 = vmatpush.bf16.msra.mxu0 0
        %1127 = vmatpush.bf16.msra.mxu0 0
        %1128 = vmatpush.bf16.msra.mxu0 0
        %1129 = vmatpush.bf16.msra.mxu0 0
        %1130 = vmatpush.bf16.msra.mxu0 0
        %1131 = vmatpush.bf16.msra.mxu0 %v1119
        %1132 = vmatpush.bf16.msra.mxu0 %v1118
        %1133 = vmatmul.bf16.gmra.mxu0 %v1123
        %v1134 = vpop.f32.mrf.mxu0
        %v1135 = vadd.f32 %v1109, %v1134
        %v1136 = vpop.f32.mrf.mxu0
        %v1137 = vadd.f32 %v1109, %v1136
        %1138 = vdwg.mxu0
        %v1139 = vadd.f32 %v1106, %v1135
        %v1140 = vadd.f32 %v1107, %v1137
        %v1141 = vsel %vm401, %v1139, 0.0
        %1142 = vadd.xlane.f32.xlu0 %v1141
        %v1143 = vpop.xlane.xlu0 %1142
        %v1144 = vsel %vm401, %v1140, 0.0
        %1145 = vadd.xlane.f32.xlu0 %v1144
        %v1146 = vpop.xlane.xlu0 %1145
        %v1147 = vmul.f32 %v1143, %v1063
        %v1148 = vmul.f32 %v1146, %v1063
        %v1149 = vsub.f32 %v1139, %v1147
        %v1150 = vsub.f32 %v1140, %v1148
        %v1151 = vmul.f32 %v1149, %v1149
        %v1152 = vmul.f32 %v1150, %v1150
        %v1153 = vsel %vm401, %v1151, 0.0
        %1154 = vadd.xlane.f32.xlu0 %v1153
        %v1155 = vpop.xlane.xlu0 %1154
        %v1156 = vsel %vm401, %v1152, 0.0
        %1157 = vadd.xlane.f32.xlu0 %v1156
        %v1158 = vpop.xlane.xlu0 %1157
        %v1159 = vmul.f32 %v1155, %v1063
        %v1160 = vmul.f32 %v1158, %v1063
        %v1161 = vadd.f32 %v1159, 1e-05
        %v1162 = vadd.f32 %v1160, 1e-05
        %v1163 = vrsqrt.pop %v1161
        %v1164 = vmul.f32 %v1163, %v1161
        %v1165 = vmul.f32 %v1164, %v1163
        %v1166 = vmul.f32 0.5, %v1165
        %v1167 = vsub.f32 1.5, %v1166
        %v1168 = vmul.f32 %v1163, %v1167
        %vm1169 = vweird.f32 %v1161
        %vm1170 = vweird.f32 %v1163
        %vm1171 = vmor %vm1169, %vm1170
        %v1172 = vsel %vm1171, %v1163, %v1168
        %v1173 = vrsqrt.pop %v1162
        %v1174 = vmul.f32 %v1173, %v1162
        %v1175 = vmul.f32 %v1174, %v1173
        %v1176 = vmul.f32 0.5, %v1175
        %v1177 = vsub.f32 1.5, %v1176
        %v1178 = vmul.f32 %v1173, %v1177
        %vm1179 = vweird.f32 %v1162
        %vm1180 = vweird.f32 %v1173
        %vm1181 = vmor %vm1179, %vm1180
        %v1182 = vsel %vm1181, %v1173, %v1178
        %v1183 = vmul.f32 %v1149, %v1172
        %v1184 = vmul.f32 %v1150, %v1182
        %v1185 = vperm.slane %v387, 0
        %v1186 = vmul.f32 %v1183, %v1185
        %v1187 = vmul.f32 %v1184, %v1185
        %v1188 = vperm.slane %v388, 0
        %v1189 = vadd.f32 %v1186, %v1188
        %v1190 = vadd.f32 %v1187, %v1188
        %1191 = vst.msk [vmem:[#allocation2] sm:$0xff] %vm401, %v1189
        %1192 = vst.msk [vmem:[#allocation2 + $0x8] sm:$0xff] %vm401, %v1190
        %p1193 = scmp.eq.s32.totalorder %s28, 1
        // Predicated region
        $region53: #{tpu_custom_call.1} parent=39 // pred_check
          %p1194 = pneg %p1193
        $region54: #{tpu_custom_call.1} parent=39 // pred_check_branch
          %1196 = sbr.rel (%p1194) target = $region56
        $region55: #{tpu_custom_call.1} parent=39 // pred_region
          %1197 = vst.msk [vmem:[#allocation8] sm:$0xff] %vm401, %v1189
          %1198 = vst.msk [vmem:[#allocation8 + $0x8] sm:$0xff] %vm401, %v1190
        $region56: #{tpu_custom_call.1} parent=39 // pred_fallthru
          _
        // Predicated region
        $region57: #{tpu_custom_call.1} parent=39 // pred_check
          %p1199 = pneg %p183
        $region58: #{tpu_custom_call.1} parent=39 // pred_check_branch
          %1201 = sbr.rel (%p1199) target = $region60
        $region59: #{tpu_custom_call.1} parent=39 // pred_region
          %s1202 = smul.u32 2, %s27
          %1204 = vsyncadd [#allocation5], 0
          %s1205 = smul.addr %s1202, 8
          %s1206 = scalar_lea.hbm %s5, %s1205
          %s1207 = sshll.u32 [#allocation8], 4
          %s1208 = int_to_ptr.vmem [resolvable:$true] %s1207
          %s1209 = sshll.u32 %s1206, 4
          %s1210 = int_to_ptr.hbm [resolvable:$true] %s1209
          %1215 = dma.vmem_to_hbm [thread:$0]  %s1208, 256, %s1210, [#allocation5], 128, 128, 8
        $region60: #{tpu_custom_call.1} parent=39 // pred_fallthru
          _
        // Predicated region
        $region61: #{tpu_custom_call.1} parent=39 // pred_check
          %p1216 = pneg %p183
        $region62: #{tpu_custom_call.1} parent=39 // pred_check_branch
          %1218 = sbr.rel (%p1216) target = $region64
        $region63: #{tpu_custom_call.1} parent=39 // pred_region
          %1220 = dma.done [#allocation5], 256
        $region64: #{tpu_custom_call.1} parent=39 // pred_fallthru
          _
      $region40: #{tpu_custom_call.1} parent=5 // pred_fallthru
        _
      %p1221 = scmp.le.s32.totalorder 2, %s18
      // Predicated region
      $region65: #{tpu_custom_call.1} parent=5 // pred_check
        %p1222 = pneg %p1221
      $region66: #{tpu_custom_call.1} parent=5 // pred_check_branch
        %1224 = sbr.rel (%p1222) target = $region68
      $region67: #{tpu_custom_call.1} parent=5 // pred_region
        %s1225 = ssub.s32 %s18, 2
      $region68: #{tpu_custom_call.1} parent=5 // pred_fallthru
        _
    $region6: #{tpu_custom_call.1} parent=1 // loop_footer
      %s22 = sadd.s32 1, %s18
    $region7: #{tpu_custom_call.1} parent=1 // loop_footer_branch
      %17 = sbr.rel target = $region3
    $region8: #{tpu_custom_call.1} parent=1 // loop_exit
      _
    %1226 = vsyncpa [#allocation4], 1
    %s1227 = scalar_lea.sflag [#allocation4], 1
    %1228 = vsyncpa %s1227, 1
    %1229 = vsyncpa [#allocation7], 1
    %s1230 = scalar_lea.sflag [#allocation7], 1
    %1231 = vsyncpa %s1230, 1
    %1232 = vsyncpa [#allocation5], 1
    %s1233 = scalar_lea.sflag [#allocation5], 1
    %1234 = vsyncpa %s1233, 1

</llo_original>
